<compile_context>
chip_gen: v6e
topology: v6e:2x2x1
jax: 0.10.0
libtpu: 0.0.40
codegen_flags: <defaults>
</compile_context>

<pallas_src>
import jax
import jax.numpy as jnp
from jax import lax
from jax.experimental import pallas as pl
from jax.experimental.pallas import tpu as pltpu

VOCAB = 16      # len(model_config.idx2char)
EMB = 32        # model_config.output_size (glyph embedding output dim)
NHID = 32       # model_config.nhid
NLAYERS = 1     # model_config.nlayers (only nlayers=1 implemented, see TODO)
SEQ = 8
BATCH = 2


# --------------------------------------------------------------------------
# Single fused kernel: embedding gather + LSTM recurrence + decoder.
# --------------------------------------------------------------------------
def fused_lm_kernel(tok_ref, emb_ref, wih_ref, whh_ref, bias_ref,
                    wdec_ref, bdec_ref, h0_ref, c0_ref,
                    dec_ref, hn_ref, cn_ref,
                    out_scr):
    SB = tok_ref.shape[0]           # seq * batch (time-major, batch inner)
    B = h0_ref.shape[1]
    H = h0_ref.shape[2]
    S = SB // B

    # ---- glyph embedding lookup as one-hot @ emb_table (MXU, no dynamic
    #      indexing; emb_table stays resident in VMEM). ----
    onehot = (tok_ref[...] ==
              lax.broadcasted_iota(jnp.int32, (SB, emb_ref.shape[0]), 1)
              ).astype(jnp.float32)                           # (SB, VOCAB)
    x = jnp.dot(onehot, emb_ref[...],
                preferred_element_type=jnp.float32)           # (SB, EMB)

    # ---- hoisted input projection + pre-summed bias (b_ih + b_hh). ----
    xproj = jnp.dot(x, wih_ref[...],
                    preferred_element_type=jnp.float32) + bias_ref[...]  # (SB, 4H)

    whh = whh_ref[...]                                        # (H, 4H)
    h = h0_ref[0]                                             # (B, H)
    c = c0_ref[0]                                             # (B, H)

    # ---- unrolled time recurrence: one dependent matmul per step. ----
    # TODO(synk): multi-layer LSTM (nlayers > 1) + inter-layer dropout not
    # implemented; only the single-layer eval configuration is supported.
    for t in range(S):
        gates = xproj[t * B:(t + 1) * B, :] + jnp.dot(
            h, whh, preferred_element_type=jnp.float32)       # (B, 4H)
        i_g = jax.nn.sigmoid(gates[:, 0 * H:1 * H])
        f_g = jax.nn.sigmoid(gates[:, 1 * H:2 * H])
        g_g = jnp.tanh(gates[:, 2 * H:3 * H])
        o_g = jax.nn.sigmoid(gates[:, 3 * H:4 * H])
        c = f_g * c + i_g * g_g
        h = o_g * jnp.tanh(c)
        out_scr[pl.ds(t * B, B), :] = h                       # dense (SB,H) slab

    # ---- final hidden/cell written exactly once. ----
    hn_ref[0] = h
    cn_ref[0] = c

    # ---- decoder Linear(nhid -> vocab) on the flattened (SB, H) matrix;
    #      dropout p=0.0 / eval -> identity. ----
    dec_ref[...] = (jnp.dot(out_scr[...], wdec_ref[...],
                            preferred_element_type=jnp.float32)
                    + bdec_ref[...])


def _full_spec(*shape):
    zeros = (0,) * len(shape)
    return pl.BlockSpec(shape, lambda i, z=zeros: z)


# --------------------------------------------------------------------------
# Full forward (thin JAX glue around the single fused pallas_call).
# --------------------------------------------------------------------------
def glyph_embedding_for_lm_forward(data, hidden, params):
    S, B = data.shape
    # Flatten time-major/batch-inner to match output.view(S*B, H) ordering.
    tok = data.reshape(S * B, 1).astype(jnp.int32)
    h0, c0 = hidden

    decoded_flat, h_n, c_n = pl.pallas_call(
        fused_lm_kernel,
        out_shape=(
            jax.ShapeDtypeStruct((S * B, VOCAB), jnp.float32),
            jax.ShapeDtypeStruct((NLAYERS, B, NHID), jnp.float32),
            jax.ShapeDtypeStruct((NLAYERS, B, NHID), jnp.float32),
        ),
        grid_spec=pltpu.PrefetchScalarGridSpec(
            num_scalar_prefetch=0,
            grid=(1,),
            in_specs=[
                _full_spec(S * B, 1),               # token ids
                _full_spec(VOCAB, EMB),             # embedding table
                _full_spec(EMB, 4 * NHID),          # W_ih^T
                _full_spec(NHID, 4 * NHID),         # W_hh^T
                _full_spec(1, 4 * NHID),            # b_ih + b_hh (pre-summed)
                _full_spec(NHID, VOCAB),            # W_dec^T
                _full_spec(1, VOCAB),               # b_dec
                _full_spec(NLAYERS, B, NHID),       # h0
                _full_spec(NLAYERS, B, NHID),       # c0
            ],
            out_specs=(
                _full_spec(S * B, VOCAB),
                _full_spec(NLAYERS, B, NHID),
                _full_spec(NLAYERS, B, NHID),
            ),
            scratch_shapes=[pltpu.VMEM((S * B, NHID), jnp.float32)],
        ),
        # Sequential recurrence lives inside the kernel; grid is trivial.
        # (On v7x, a real deployment would shard a larger BATCH across the
        #  two TensorCores; at BATCH=2 there is nothing to split.)
        compiler_params=pltpu.CompilerParams(
            dimension_semantics=("arbitrary",)),
    )(tok, params["emb_table"], params["w_ih_t"], params["w_hh_t"],
      params["bias"], params["w_dec_t"], params["b_dec"], h0, c0)

    decoded = decoded_flat.reshape(S, B, VOCAB)

    # TODO(synk): CharGlyceEmbedding's glyph-CNN + auxiliary glyph
    # classification loss source was not provided; the glyph embedding is
    # emulated as an embedding lookup and the aux loss is returned as 0.0.
    glyph_classification_loss = jnp.float32(0.0)
    return decoded, (h_n, c_n), glyph_classification_loss


def init_params(key):
    ks = jax.random.split(key, 6)
    stdv = 1.0 / jnp.sqrt(jnp.float32(NHID))
    emb_table = 0.1 * jax.random.normal(ks[0], (VOCAB, EMB), jnp.float32)
    w_ih = jax.random.uniform(ks[1], (4 * NHID, EMB), jnp.float32, -stdv, stdv)
    w_hh = jax.random.uniform(ks[2], (4 * NHID, NHID), jnp.float32, -stdv, stdv)
    b_ih = jax.random.uniform(ks[3], (4 * NHID,), jnp.float32, -stdv, stdv)
    b_hh = jax.random.uniform(ks[4], (4 * NHID,), jnp.float32, -stdv, stdv)
    # decoder: init_weights() -> weight ~ U(-0.1, 0.1), bias = 0
    w_dec = jax.random.uniform(ks[5], (VOCAB, NHID), jnp.float32, -0.1, 0.1)
    b_dec = jnp.zeros((VOCAB,), jnp.float32)
    return {
        "emb_table": emb_table,
        "w_ih_t": w_ih.T,                              # (EMB, 4*NHID)
        "w_hh_t": w_hh.T,                              # (NHID, 4*NHID)
        "bias": (b_ih + b_hh).reshape(1, 4 * NHID),    # pre-summed at init
        "w_dec_t": w_dec.T,                            # (NHID, VOCAB)
        "b_dec": b_dec.reshape(1, VOCAB),
    }


if __name__ == "__main__":
    key = jax.random.PRNGKey(0)
    pkey, dkey = jax.random.split(key)
    params = init_params(pkey)

    # data: (seq, batch) int token ids; hidden: init_hidden(batch) zeros.
    data = jax.random.randint(dkey, (SEQ, BATCH), 0, VOCAB, dtype=jnp.int32)
    h0 = jnp.zeros((NLAYERS, BATCH, NHID), jnp.float32)
    c0 = jnp.zeros((NLAYERS, BATCH, NHID), jnp.float32)

    fwd = jax.jit(glyph_embedding_for_lm_forward)
    decoded, (h_n, c_n), loss = fwd(data, (h0, c0), params)
    jax.block_until_ready((decoded, h_n, c_n, loss))

    assert decoded.shape == (SEQ, BATCH, VOCAB)
    assert h_n.shape == (NLAYERS, BATCH, NHID)
    assert c_n.shape == (NLAYERS, BATCH, NHID)
    print("KERNEL_OK")
</pallas_src>

<mosaic_0001>
module attributes {stable_mosaic.version = 11 : i64} {
  func.func @fused_lm_kernel(%arg0: i32, %arg1: memref<16x1xi32, #tpu.memory_space<vmem>>, %arg2: memref<16x32xf32, #tpu.memory_space<vmem>>, %arg3: memref<32x128xf32, #tpu.memory_space<vmem>>, %arg4: memref<32x128xf32, #tpu.memory_space<vmem>>, %arg5: memref<1x128xf32, #tpu.memory_space<vmem>>, %arg6: memref<32x16xf32, #tpu.memory_space<vmem>>, %arg7: memref<1x16xf32, #tpu.memory_space<vmem>>, %arg8: memref<1x2x32xf32, #tpu.memory_space<vmem>>, %arg9: memref<1x2x32xf32, #tpu.memory_space<vmem>>, %arg10: memref<16x16xf32, #tpu.memory_space<vmem>>, %arg11: memref<1x2x32xf32, #tpu.memory_space<vmem>>, %arg12: memref<1x2x32xf32, #tpu.memory_space<vmem>>, %arg13: memref<16x32xf32, #tpu.memory_space<vmem>>) attributes {dimension_semantics = [#tpu.dimension_semantics<arbitrary>], iteration_bounds = array<i64: 1>, scalar_prefetch = 0 : i64, scratch_operands = 1 : i64, tpu.core_type = #tpu.core_type<tc>, window_params = [{pipeline_mode = #tpu.pipeline_mode<synchronous>, transform_indices = @transform_0, window_bounds = array<i64: 16, 1>}, {pipeline_mode = #tpu.pipeline_mode<synchronous>, transform_indices = @transform_1, window_bounds = array<i64: 16, 32>}, {pipeline_mode = #tpu.pipeline_mode<synchronous>, transform_indices = @transform_2, window_bounds = array<i64: 32, 128>}, {pipeline_mode = #tpu.pipeline_mode<synchronous>, transform_indices = @transform_3, window_bounds = array<i64: 32, 128>}, {pipeline_mode = #tpu.pipeline_mode<synchronous>, transform_indices = @transform_4, window_bounds = array<i64: 1, 128>}, {pipeline_mode = #tpu.pipeline_mode<synchronous>, transform_indices = @transform_5, window_bounds = array<i64: 32, 16>}, {pipeline_mode = #tpu.pipeline_mode<synchronous>, transform_indices = @transform_6, window_bounds = array<i64: 1, 16>}, {pipeline_mode = #tpu.pipeline_mode<synchronous>, transform_indices = @transform_7, window_bounds = array<i64: 1, 2, 32>}, {pipeline_mode = #tpu.pipeline_mode<synchronous>, transform_indices = @transform_8, window_bounds = array<i64: 1, 2, 32>}, {pipeline_mode = #tpu.pipeline_mode<synchronous>, transform_indices = @transform_9, window_bounds = array<i64: 16, 16>}, {pipeline_mode = #tpu.pipeline_mode<synchronous>, transform_indices = @transform_10, window_bounds = array<i64: 1, 2, 32>}, {pipeline_mode = #tpu.pipeline_mode<synchronous>, transform_indices = @transform_11, window_bounds = array<i64: 1, 2, 32>}]} {
    %c0 = arith.constant 0 : index
    %c0_0 = arith.constant 0 : index
    %0 = vector.load %arg1[%c0, %c0_0] : memref<16x1xi32, #tpu.memory_space<vmem>>, vector<16x1xi32>
    %1 = tpu.iota {dimensions = array<i32: 1>} : vector<16x16xi32>
    %2 = vector.broadcast %0 : vector<16x1xi32> to vector<16x16xi32>
    %3 = arith.cmpi eq, %2, %1 : vector<16x16xi32>
    %4 = arith.extui %3 : vector<16x16xi1> to vector<16x16xi32>
    %5 = arith.sitofp %4 : vector<16x16xi32> to vector<16x16xf32>
    %c0_1 = arith.constant 0 : index
    %c0_2 = arith.constant 0 : index
    %6 = vector.load %arg2[%c0_1, %c0_2] : memref<16x32xf32, #tpu.memory_space<vmem>>, vector<16x32xf32>
    %cst = arith.constant dense<0.000000e+00> : vector<16x32xf32>
    %7 = tpu.matmul %5, %6, %cst {dimension_numbers = #tpu.dot_dimension_numbers<[1], [0], [0], [1], [0, 0, 1, 1], [], []>} : vector<16x16xf32>, vector<16x32xf32>, vector<16x32xf32> -> vector<16x32xf32>
    %c0_3 = arith.constant 0 : index
    %c0_4 = arith.constant 0 : index
    %8 = vector.load %arg3[%c0_3, %c0_4] : memref<32x128xf32, #tpu.memory_space<vmem>>, vector<32x128xf32>
    %cst_5 = arith.constant dense<0.000000e+00> : vector<16x128xf32>
    %9 = tpu.matmul %7, %8, %cst_5 {dimension_numbers = #tpu.dot_dimension_numbers<[1], [0], [0], [1], [0, 0, 1, 1], [], []>} : vector<16x32xf32>, vector<32x128xf32>, vector<16x128xf32> -> vector<16x128xf32>
    %c0_6 = arith.constant 0 : index
    %c0_7 = arith.constant 0 : index
    %10 = vector.load %arg5[%c0_6, %c0_7] : memref<1x128xf32, #tpu.memory_space<vmem>>, vector<1x128xf32>
    %11 = vector.broadcast %10 : vector<1x128xf32> to vector<16x128xf32>
    %12 = arith.addf %9, %11 : vector<16x128xf32>
    %c0_8 = arith.constant 0 : index
    %c0_9 = arith.constant 0 : index
    %13 = vector.load %arg4[%c0_8, %c0_9] : memref<32x128xf32, #tpu.memory_space<vmem>>, vector<32x128xf32>
    %c0_10 = arith.constant 0 : index
    %c0_11 = arith.constant 0 : index
    %c0_12 = arith.constant 0 : index
    %14 = vector.load %arg8[%c0_10, %c0_11, %c0_12] : memref<1x2x32xf32, #tpu.memory_space<vmem>>, vector<1x2x32xf32>
    %15 = vector.shape_cast %14 : vector<1x2x32xf32> to vector<2x32xf32>
    %c0_13 = arith.constant 0 : index
    %c0_14 = arith.constant 0 : index
    %c0_15 = arith.constant 0 : index
    %16 = vector.load %arg9[%c0_13, %c0_14, %c0_15] : memref<1x2x32xf32, #tpu.memory_space<vmem>>, vector<1x2x32xf32>
    %17 = vector.shape_cast %16 : vector<1x2x32xf32> to vector<2x32xf32>
    %18 = vector.extract_strided_slice %12 {offsets = [0, 0], sizes = [2, 128], strides = [1, 1]} : vector<16x128xf32> to vector<2x128xf32>
    %cst_16 = arith.constant dense<0.000000e+00> : vector<2x128xf32>
    %19 = tpu.matmul %15, %13, %cst_16 {dimension_numbers = #tpu.dot_dimension_numbers<[1], [0], [0], [1], [0, 0, 1, 1], [], []>} : vector<2x32xf32>, vector<32x128xf32>, vector<2x128xf32> -> vector<2x128xf32>
    %20 = arith.addf %18, %19 : vector<2x128xf32>
    %21 = vector.extract_strided_slice %20 {offsets = [0, 0], sizes = [2, 32], strides = [1, 1]} : vector<2x128xf32> to vector<2x32xf32>
    %22 = arith.negf %21 : vector<2x32xf32>
    %23 = math.exp %22 : vector<2x32xf32>
    %cst_17 = arith.constant 1.000000e+00 : f32
    %24 = vector.broadcast %cst_17 : f32 to vector<2x32xf32>
    %25 = arith.addf %24, %23 : vector<2x32xf32>
    %26 = arith.divf %24, %25 : vector<2x32xf32>
    %27 = vector.extract_strided_slice %20 {offsets = [0, 32], sizes = [2, 32], strides = [1, 1]} : vector<2x128xf32> to vector<2x32xf32>
    %28 = arith.negf %27 : vector<2x32xf32>
    %29 = math.exp %28 : vector<2x32xf32>
    %cst_18 = arith.constant 1.000000e+00 : f32
    %30 = vector.broadcast %cst_18 : f32 to vector<2x32xf32>
    %31 = arith.addf %30, %29 : vector<2x32xf32>
    %32 = arith.divf %30, %31 : vector<2x32xf32>
    %33 = vector.extract_strided_slice %20 {offsets = [0, 64], sizes = [2, 32], strides = [1, 1]} : vector<2x128xf32> to vector<2x32xf32>
    %34 = math.tanh %33 : vector<2x32xf32>
    %35 = vector.extract_strided_slice %20 {offsets = [0, 96], sizes = [2, 32], strides = [1, 1]} : vector<2x128xf32> to vector<2x32xf32>
    %36 = arith.negf %35 : vector<2x32xf32>
    %37 = math.exp %36 : vector<2x32xf32>
    %cst_19 = arith.constant 1.000000e+00 : f32
    %38 = vector.broadcast %cst_19 : f32 to vector<2x32xf32>
    %39 = arith.addf %38, %37 : vector<2x32xf32>
    %40 = arith.divf %38, %39 : vector<2x32xf32>
    %41 = arith.mulf %32, %17 : vector<2x32xf32>
    %42 = arith.mulf %26, %34 : vector<2x32xf32>
    %43 = arith.addf %41, %42 : vector<2x32xf32>
    %44 = math.tanh %43 : vector<2x32xf32>
    %45 = arith.mulf %40, %44 : vector<2x32xf32>
    %c0_20 = arith.constant 0 : index
    %c0_21 = arith.constant 0 : index
    %46 = vector.load %arg13[%c0_20, %c0_21] : memref<16x32xf32, #tpu.memory_space<vmem>>, vector<2x32xf32>
    tpu.vector_store %arg13[%c0_20, %c0_21], %45 {strides = array<i32>} : memref<16x32xf32, #tpu.memory_space<vmem>>, vector<2x32xf32>,
    %47 = vector.extract_strided_slice %12 {offsets = [2, 0], sizes = [2, 128], strides = [1, 1]} : vector<16x128xf32> to vector<2x128xf32>
    %cst_22 = arith.constant dense<0.000000e+00> : vector<2x128xf32>
    %48 = tpu.matmul %45, %13, %cst_22 {dimension_numbers = #tpu.dot_dimension_numbers<[1], [0], [0], [1], [0, 0, 1, 1], [], []>} : vector<2x32xf32>, vector<32x128xf32>, vector<2x128xf32> -> vector<2x128xf32>
    %49 = arith.addf %47, %48 : vector<2x128xf32>
    %50 = vector.extract_strided_slice %49 {offsets = [0, 0], sizes = [2, 32], strides = [1, 1]} : vector<2x128xf32> to vector<2x32xf32>
    %51 = arith.negf %50 : vector<2x32xf32>
    %52 = math.exp %51 : vector<2x32xf32>
    %cst_23 = arith.constant 1.000000e+00 : f32
    %53 = vector.broadcast %cst_23 : f32 to vector<2x32xf32>
    %54 = arith.addf %53, %52 : vector<2x32xf32>
    %55 = arith.divf %53, %54 : vector<2x32xf32>
    %56 = vector.extract_strided_slice %49 {offsets = [0, 32], sizes = [2, 32], strides = [1, 1]} : vector<2x128xf32> to vector<2x32xf32>
    %57 = arith.negf %56 : vector<2x32xf32>
    %58 = math.exp %57 : vector<2x32xf32>
    %cst_24 = arith.constant 1.000000e+00 : f32
    %59 = vector.broadcast %cst_24 : f32 to vector<2x32xf32>
    %60 = arith.addf %59, %58 : vector<2x32xf32>
    %61 = arith.divf %59, %60 : vector<2x32xf32>
    %62 = vector.extract_strided_slice %49 {offsets = [0, 64], sizes = [2, 32], strides = [1, 1]} : vector<2x128xf32> to vector<2x32xf32>
    %63 = math.tanh %62 : vector<2x32xf32>
    %64 = vector.extract_strided_slice %49 {offsets = [0, 96], sizes = [2, 32], strides = [1, 1]} : vector<2x128xf32> to vector<2x32xf32>
    %65 = arith.negf %64 : vector<2x32xf32>
    %66 = math.exp %65 : vector<2x32xf32>
    %cst_25 = arith.constant 1.000000e+00 : f32
    %67 = vector.broadcast %cst_25 : f32 to vector<2x32xf32>
    %68 = arith.addf %67, %66 : vector<2x32xf32>
    %69 = arith.divf %67, %68 : vector<2x32xf32>
    %70 = arith.mulf %61, %43 : vector<2x32xf32>
    %71 = arith.mulf %55, %63 : vector<2x32xf32>
    %72 = arith.addf %70, %71 : vector<2x32xf32>
    %73 = math.tanh %72 : vector<2x32xf32>
    %74 = arith.mulf %69, %73 : vector<2x32xf32>
    %c2 = arith.constant 2 : index
    %c0_26 = arith.constant 0 : index
    %75 = vector.load %arg13[%c2, %c0_26] : memref<16x32xf32, #tpu.memory_space<vmem>>, vector<2x32xf32>
    tpu.vector_store %arg13[%c2, %c0_26], %74 {strides = array<i32>} : memref<16x32xf32, #tpu.memory_space<vmem>>, vector<2x32xf32>,
    %76 = vector.extract_strided_slice %12 {offsets = [4, 0], sizes = [2, 128], strides = [1, 1]} : vector<16x128xf32> to vector<2x128xf32>
    %cst_27 = arith.constant dense<0.000000e+00> : vector<2x128xf32>
    %77 = tpu.matmul %74, %13, %cst_27 {dimension_numbers = #tpu.dot_dimension_numbers<[1], [0], [0], [1], [0, 0, 1, 1], [], []>} : vector<2x32xf32>, vector<32x128xf32>, vector<2x128xf32> -> vector<2x128xf32>
    %78 = arith.addf %76, %77 : vector<2x128xf32>
    %79 = vector.extract_strided_slice %78 {offsets = [0, 0], sizes = [2, 32], strides = [1, 1]} : vector<2x128xf32> to vector<2x32xf32>
    %80 = arith.negf %79 : vector<2x32xf32>
    %81 = math.exp %80 : vector<2x32xf32>
    %cst_28 = arith.constant 1.000000e+00 : f32
    %82 = vector.broadcast %cst_28 : f32 to vector<2x32xf32>
    %83 = arith.addf %82, %81 : vector<2x32xf32>
    %84 = arith.divf %82, %83 : vector<2x32xf32>
    %85 = vector.extract_strided_slice %78 {offsets = [0, 32], sizes = [2, 32], strides = [1, 1]} : vector<2x128xf32> to vector<2x32xf32>
    %86 = arith.negf %85 : vector<2x32xf32>
    %87 = math.exp %86 : vector<2x32xf32>
    %cst_29 = arith.constant 1.000000e+00 : f32
    %88 = vector.broadcast %cst_29 : f32 to vector<2x32xf32>
    %89 = arith.addf %88, %87 : vector<2x32xf32>
    %90 = arith.divf %88, %89 : vector<2x32xf32>
    %91 = vector.extract_strided_slice %78 {offsets = [0, 64], sizes = [2, 32], strides = [1, 1]} : vector<2x128xf32> to vector<2x32xf32>
    %92 = math.tanh %91 : vector<2x32xf32>
    %93 = vector.extract_strided_slice %78 {offsets = [0, 96], sizes = [2, 32], strides = [1, 1]} : vector<2x128xf32> to vector<2x32xf32>
    %94 = arith.negf %93 : vector<2x32xf32>
    %95 = math.exp %94 : vector<2x32xf32>
    %cst_30 = arith.constant 1.000000e+00 : f32
    %96 = vector.broadcast %cst_30 : f32 to vector<2x32xf32>
    %97 = arith.addf %96, %95 : vector<2x32xf32>
    %98 = arith.divf %96, %97 : vector<2x32xf32>
    %99 = arith.mulf %90, %72 : vector<2x32xf32>
    %100 = arith.mulf %84, %92 : vector<2x32xf32>
    %101 = arith.addf %99, %100 : vector<2x32xf32>
    %102 = math.tanh %101 : vector<2x32xf32>
    %103 = arith.mulf %98, %102 : vector<2x32xf32>
    %c4 = arith.constant 4 : index
    %c0_31 = arith.constant 0 : index
    %104 = vector.load %arg13[%c4, %c0_31] : memref<16x32xf32, #tpu.memory_space<vmem>>, vector<2x32xf32>
    tpu.vector_store %arg13[%c4, %c0_31], %103 {strides = array<i32>} : memref<16x32xf32, #tpu.memory_space<vmem>>, vector<2x32xf32>,
    %105 = vector.extract_strided_slice %12 {offsets = [6, 0], sizes = [2, 128], strides = [1, 1]} : vector<16x128xf32> to vector<2x128xf32>
    %cst_32 = arith.constant dense<0.000000e+00> : vector<2x128xf32>
    %106 = tpu.matmul %103, %13, %cst_32 {dimension_numbers = #tpu.dot_dimension_numbers<[1], [0], [0], [1], [0, 0, 1, 1], [], []>} : vector<2x32xf32>, vector<32x128xf32>, vector<2x128xf32> -> vector<2x128xf32>
    %107 = arith.addf %105, %106 : vector<2x128xf32>
    %108 = vector.extract_strided_slice %107 {offsets = [0, 0], sizes = [2, 32], strides = [1, 1]} : vector<2x128xf32> to vector<2x32xf32>
    %109 = arith.negf %108 : vector<2x32xf32>
    %110 = math.exp %109 : vector<2x32xf32>
    %cst_33 = arith.constant 1.000000e+00 : f32
    %111 = vector.broadcast %cst_33 : f32 to vector<2x32xf32>
    %112 = arith.addf %111, %110 : vector<2x32xf32>
    %113 = arith.divf %111, %112 : vector<2x32xf32>
    %114 = vector.extract_strided_slice %107 {offsets = [0, 32], sizes = [2, 32], strides = [1, 1]} : vector<2x128xf32> to vector<2x32xf32>
    %115 = arith.negf %114 : vector<2x32xf32>
    %116 = math.exp %115 : vector<2x32xf32>
    %cst_34 = arith.constant 1.000000e+00 : f32
    %117 = vector.broadcast %cst_34 : f32 to vector<2x32xf32>
    %118 = arith.addf %117, %116 : vector<2x32xf32>
    %119 = arith.divf %117, %118 : vector<2x32xf32>
    %120 = vector.extract_strided_slice %107 {offsets = [0, 64], sizes = [2, 32], strides = [1, 1]} : vector<2x128xf32> to vector<2x32xf32>
    %121 = math.tanh %120 : vector<2x32xf32>
    %122 = vector.extract_strided_slice %107 {offsets = [0, 96], sizes = [2, 32], strides = [1, 1]} : vector<2x128xf32> to vector<2x32xf32>
    %123 = arith.negf %122 : vector<2x32xf32>
    %124 = math.exp %123 : vector<2x32xf32>
    %cst_35 = arith.constant 1.000000e+00 : f32
    %125 = vector.broadcast %cst_35 : f32 to vector<2x32xf32>
    %126 = arith.addf %125, %124 : vector<2x32xf32>
    %127 = arith.divf %125, %126 : vector<2x32xf32>
    %128 = arith.mulf %119, %101 : vector<2x32xf32>
    %129 = arith.mulf %113, %121 : vector<2x32xf32>
    %130 = arith.addf %128, %129 : vector<2x32xf32>
    %131 = math.tanh %130 : vector<2x32xf32>
    %132 = arith.mulf %127, %131 : vector<2x32xf32>
    %c6 = arith.constant 6 : index
    %c0_36 = arith.constant 0 : index
    %133 = vector.load %arg13[%c6, %c0_36] : memref<16x32xf32, #tpu.memory_space<vmem>>, vector<2x32xf32>
    tpu.vector_store %arg13[%c6, %c0_36], %132 {strides = array<i32>} : memref<16x32xf32, #tpu.memory_space<vmem>>, vector<2x32xf32>,
    %134 = vector.extract_strided_slice %12 {offsets = [8, 0], sizes = [2, 128], strides = [1, 1]} : vector<16x128xf32> to vector<2x128xf32>
    %cst_37 = arith.constant dense<0.000000e+00> : vector<2x128xf32>
    %135 = tpu.matmul %132, %13, %cst_37 {dimension_numbers = #tpu.dot_dimension_numbers<[1], [0], [0], [1], [0, 0, 1, 1], [], []>} : vector<2x32xf32>, vector<32x128xf32>, vector<2x128xf32> -> vector<2x128xf32>
    %136 = arith.addf %134, %135 : vector<2x128xf32>
    %137 = vector.extract_strided_slice %136 {offsets = [0, 0], sizes = [2, 32], strides = [1, 1]} : vector<2x128xf32> to vector<2x32xf32>
    %138 = arith.negf %137 : vector<2x32xf32>
    %139 = math.exp %138 : vector<2x32xf32>
    %cst_38 = arith.constant 1.000000e+00 : f32
    %140 = vector.broadcast %cst_38 : f32 to vector<2x32xf32>
    %141 = arith.addf %140, %139 : vector<2x32xf32>
    %142 = arith.divf %140, %141 : vector<2x32xf32>
    %143 = vector.extract_strided_slice %136 {offsets = [0, 32], sizes = [2, 32], strides = [1, 1]} : vector<2x128xf32> to vector<2x32xf32>
    %144 = arith.negf %143 : vector<2x32xf32>
    %145 = math.exp %144 : vector<2x32xf32>
    %cst_39 = arith.constant 1.000000e+00 : f32
    %146 = vector.broadcast %cst_39 : f32 to vector<2x32xf32>
    %147 = arith.addf %146, %145 : vector<2x32xf32>
    %148 = arith.divf %146, %147 : vector<2x32xf32>
    %149 = vector.extract_strided_slice %136 {offsets = [0, 64], sizes = [2, 32], strides = [1, 1]} : vector<2x128xf32> to vector<2x32xf32>
    %150 = math.tanh %149 : vector<2x32xf32>
    %151 = vector.extract_strided_slice %136 {offsets = [0, 96], sizes = [2, 32], strides = [1, 1]} : vector<2x128xf32> to vector<2x32xf32>
    %152 = arith.negf %151 : vector<2x32xf32>
    %153 = math.exp %152 : vector<2x32xf32>
    %cst_40 = arith.constant 1.000000e+00 : f32
    %154 = vector.broadcast %cst_40 : f32 to vector<2x32xf32>
    %155 = arith.addf %154, %153 : vector<2x32xf32>
    %156 = arith.divf %154, %155 : vector<2x32xf32>
    %157 = arith.mulf %148, %130 : vector<2x32xf32>
    %158 = arith.mulf %142, %150 : vector<2x32xf32>
    %159 = arith.addf %157, %158 : vector<2x32xf32>
    %160 = math.tanh %159 : vector<2x32xf32>
    %161 = arith.mulf %156, %160 : vector<2x32xf32>
    %c8 = arith.constant 8 : index
    %c0_41 = arith.constant 0 : index
    %162 = vector.load %arg13[%c8, %c0_41] : memref<16x32xf32, #tpu.memory_space<vmem>>, vector<2x32xf32>
    tpu.vector_store %arg13[%c8, %c0_41], %161 {strides = array<i32>} : memref<16x32xf32, #tpu.memory_space<vmem>>, vector<2x32xf32>,
    %163 = vector.extract_strided_slice %12 {offsets = [10, 0], sizes = [2, 128], strides = [1, 1]} : vector<16x128xf32> to vector<2x128xf32>
    %cst_42 = arith.constant dense<0.000000e+00> : vector<2x128xf32>
    %164 = tpu.matmul %161, %13, %cst_42 {dimension_numbers = #tpu.dot_dimension_numbers<[1], [0], [0], [1], [0, 0, 1, 1], [], []>} : vector<2x32xf32>, vector<32x128xf32>, vector<2x128xf32> -> vector<2x128xf32>
    %165 = arith.addf %163, %164 : vector<2x128xf32>
    %166 = vector.extract_strided_slice %165 {offsets = [0, 0], sizes = [2, 32], strides = [1, 1]} : vector<2x128xf32> to vector<2x32xf32>
    %167 = arith.negf %166 : vector<2x32xf32>
    %168 = math.exp %167 : vector<2x32xf32>
    %cst_43 = arith.constant 1.000000e+00 : f32
    %169 = vector.broadcast %cst_43 : f32 to vector<2x32xf32>
    %170 = arith.addf %169, %168 : vector<2x32xf32>
    %171 = arith.divf %169, %170 : vector<2x32xf32>
    %172 = vector.extract_strided_slice %165 {offsets = [0, 32], sizes = [2, 32], strides = [1, 1]} : vector<2x128xf32> to vector<2x32xf32>
    %173 = arith.negf %172 : vector<2x32xf32>
    %174 = math.exp %173 : vector<2x32xf32>
    %cst_44 = arith.constant 1.000000e+00 : f32
    %175 = vector.broadcast %cst_44 : f32 to vector<2x32xf32>
    %176 = arith.addf %175, %174 : vector<2x32xf32>
    %177 = arith.divf %175, %176 : vector<2x32xf32>
    %178 = vector.extract_strided_slice %165 {offsets = [0, 64], sizes = [2, 32], strides = [1, 1]} : vector<2x128xf32> to vector<2x32xf32>
    %179 = math.tanh %178 : vector<2x32xf32>
    %180 = vector.extract_strided_slice %165 {offsets = [0, 96], sizes = [2, 32], strides = [1, 1]} : vector<2x128xf32> to vector<2x32xf32>
    %181 = arith.negf %180 : vector<2x32xf32>
    %182 = math.exp %181 : vector<2x32xf32>
    %cst_45 = arith.constant 1.000000e+00 : f32
    %183 = vector.broadcast %cst_45 : f32 to vector<2x32xf32>
    %184 = arith.addf %183, %182 : vector<2x32xf32>
    %185 = arith.divf %183, %184 : vector<2x32xf32>
    %186 = arith.mulf %177, %159 : vector<2x32xf32>
    %187 = arith.mulf %171, %179 : vector<2x32xf32>
    %188 = arith.addf %186, %187 : vector<2x32xf32>
    %189 = math.tanh %188 : vector<2x32xf32>
    %190 = arith.mulf %185, %189 : vector<2x32xf32>
    %c10 = arith.constant 10 : index
    %c0_46 = arith.constant 0 : index
    %191 = vector.load %arg13[%c10, %c0_46] : memref<16x32xf32, #tpu.memory_space<vmem>>, vector<2x32xf32>
    tpu.vector_store %arg13[%c10, %c0_46], %190 {strides = array<i32>} : memref<16x32xf32, #tpu.memory_space<vmem>>, vector<2x32xf32>,
    %192 = vector.extract_strided_slice %12 {offsets = [12, 0], sizes = [2, 128], strides = [1, 1]} : vector<16x128xf32> to vector<2x128xf32>
    %cst_47 = arith.constant dense<0.000000e+00> : vector<2x128xf32>
    %193 = tpu.matmul %190, %13, %cst_47 {dimension_numbers = #tpu.dot_dimension_numbers<[1], [0], [0], [1], [0, 0, 1, 1], [], []>} : vector<2x32xf32>, vector<32x128xf32>, vector<2x128xf32> -> vector<2x128xf32>
    %194 = arith.addf %192, %193 : vector<2x128xf32>
    %195 = vector.extract_strided_slice %194 {offsets = [0, 0], sizes = [2, 32], strides = [1, 1]} : vector<2x128xf32> to vector<2x32xf32>
    %196 = arith.negf %195 : vector<2x32xf32>
    %197 = math.exp %196 : vector<2x32xf32>
    %cst_48 = arith.constant 1.000000e+00 : f32
    %198 = vector.broadcast %cst_48 : f32 to vector<2x32xf32>
    %199 = arith.addf %198, %197 : vector<2x32xf32>
    %200 = arith.divf %198, %199 : vector<2x32xf32>
    %201 = vector.extract_strided_slice %194 {offsets = [0, 32], sizes = [2, 32], strides = [1, 1]} : vector<2x128xf32> to vector<2x32xf32>
    %202 = arith.negf %201 : vector<2x32xf32>
    %203 = math.exp %202 : vector<2x32xf32>
    %cst_49 = arith.constant 1.000000e+00 : f32
    %204 = vector.broadcast %cst_49 : f32 to vector<2x32xf32>
    %205 = arith.addf %204, %203 : vector<2x32xf32>
    %206 = arith.divf %204, %205 : vector<2x32xf32>
    %207 = vector.extract_strided_slice %194 {offsets = [0, 64], sizes = [2, 32], strides = [1, 1]} : vector<2x128xf32> to vector<2x32xf32>
    %208 = math.tanh %207 : vector<2x32xf32>
    %209 = vector.extract_strided_slice %194 {offsets = [0, 96], sizes = [2, 32], strides = [1, 1]} : vector<2x128xf32> to vector<2x32xf32>
    %210 = arith.negf %209 : vector<2x32xf32>
    %211 = math.exp %210 : vector<2x32xf32>
    %cst_50 = arith.constant 1.000000e+00 : f32
    %212 = vector.broadcast %cst_50 : f32 to vector<2x32xf32>
    %213 = arith.addf %212, %211 : vector<2x32xf32>
    %214 = arith.divf %212, %213 : vector<2x32xf32>
    %215 = arith.mulf %206, %188 : vector<2x32xf32>
    %216 = arith.mulf %200, %208 : vector<2x32xf32>
    %217 = arith.addf %215, %216 : vector<2x32xf32>
    %218 = math.tanh %217 : vector<2x32xf32>
    %219 = arith.mulf %214, %218 : vector<2x32xf32>
    %c12 = arith.constant 12 : index
    %c0_51 = arith.constant 0 : index
    %220 = vector.load %arg13[%c12, %c0_51] : memref<16x32xf32, #tpu.memory_space<vmem>>, vector<2x32xf32>
    tpu.vector_store %arg13[%c12, %c0_51], %219 {strides = array<i32>} : memref<16x32xf32, #tpu.memory_space<vmem>>, vector<2x32xf32>,
    %221 = vector.extract_strided_slice %12 {offsets = [14, 0], sizes = [2, 128], strides = [1, 1]} : vector<16x128xf32> to vector<2x128xf32>
    %cst_52 = arith.constant dense<0.000000e+00> : vector<2x128xf32>
    %222 = tpu.matmul %219, %13, %cst_52 {dimension_numbers = #tpu.dot_dimension_numbers<[1], [0], [0], [1], [0, 0, 1, 1], [], []>} : vector<2x32xf32>, vector<32x128xf32>, vector<2x128xf32> -> vector<2x128xf32>
    %223 = arith.addf %221, %222 : vector<2x128xf32>
    %224 = vector.extract_strided_slice %223 {offsets = [0, 0], sizes = [2, 32], strides = [1, 1]} : vector<2x128xf32> to vector<2x32xf32>
    %225 = arith.negf %224 : vector<2x32xf32>
    %226 = math.exp %225 : vector<2x32xf32>
    %cst_53 = arith.constant 1.000000e+00 : f32
    %227 = vector.broadcast %cst_53 : f32 to vector<2x32xf32>
    %228 = arith.addf %227, %226 : vector<2x32xf32>
    %229 = arith.divf %227, %228 : vector<2x32xf32>
    %230 = vector.extract_strided_slice %223 {offsets = [0, 32], sizes = [2, 32], strides = [1, 1]} : vector<2x128xf32> to vector<2x32xf32>
    %231 = arith.negf %230 : vector<2x32xf32>
    %232 = math.exp %231 : vector<2x32xf32>
    %cst_54 = arith.constant 1.000000e+00 : f32
    %233 = vector.broadcast %cst_54 : f32 to vector<2x32xf32>
    %234 = arith.addf %233, %232 : vector<2x32xf32>
    %235 = arith.divf %233, %234 : vector<2x32xf32>
    %236 = vector.extract_strided_slice %223 {offsets = [0, 64], sizes = [2, 32], strides = [1, 1]} : vector<2x128xf32> to vector<2x32xf32>
    %237 = math.tanh %236 : vector<2x32xf32>
    %238 = vector.extract_strided_slice %223 {offsets = [0, 96], sizes = [2, 32], strides = [1, 1]} : vector<2x128xf32> to vector<2x32xf32>
    %239 = arith.negf %238 : vector<2x32xf32>
    %240 = math.exp %239 : vector<2x32xf32>
    %cst_55 = arith.constant 1.000000e+00 : f32
    %241 = vector.broadcast %cst_55 : f32 to vector<2x32xf32>
    %242 = arith.addf %241, %240 : vector<2x32xf32>
    %243 = arith.divf %241, %242 : vector<2x32xf32>
    %244 = arith.mulf %235, %217 : vector<2x32xf32>
    %245 = arith.mulf %229, %237 : vector<2x32xf32>
    %246 = arith.addf %244, %245 : vector<2x32xf32>
    %247 = math.tanh %246 : vector<2x32xf32>
    %248 = arith.mulf %243, %247 : vector<2x32xf32>
    %c14 = arith.constant 14 : index
    %c0_56 = arith.constant 0 : index
    %249 = vector.load %arg13[%c14, %c0_56] : memref<16x32xf32, #tpu.memory_space<vmem>>, vector<2x32xf32>
    tpu.vector_store %arg13[%c14, %c0_56], %248 {strides = array<i32>} : memref<16x32xf32, #tpu.memory_space<vmem>>, vector<2x32xf32>,
    %c0_57 = arith.constant 0 : index
    %c0_58 = arith.constant 0 : index
    %c0_59 = arith.constant 0 : index
    %250 = vector.load %arg11[%c0_57, %c0_58, %c0_59] : memref<1x2x32xf32, #tpu.memory_space<vmem>>, vector<1x2x32xf32>
    %251 = vector.shape_cast %250 : vector<1x2x32xf32> to vector<2x32xf32>
    %252 = vector.shape_cast %248 : vector<2x32xf32> to vector<1x2x32xf32>
    tpu.vector_store %arg11[%c0_57, %c0_58, %c0_59], %252 {strides = array<i32>} : memref<1x2x32xf32, #tpu.memory_space<vmem>>, vector<1x2x32xf32>,
    %c0_60 = arith.constant 0 : index
    %c0_61 = arith.constant 0 : index
    %c0_62 = arith.constant 0 : index
    %253 = vector.load %arg12[%c0_60, %c0_61, %c0_62] : memref<1x2x32xf32, #tpu.memory_space<vmem>>, vector<1x2x32xf32>
    %254 = vector.shape_cast %253 : vector<1x2x32xf32> to vector<2x32xf32>
    %255 = vector.shape_cast %246 : vector<2x32xf32> to vector<1x2x32xf32>
    tpu.vector_store %arg12[%c0_60, %c0_61, %c0_62], %255 {strides = array<i32>} : memref<1x2x32xf32, #tpu.memory_space<vmem>>, vector<1x2x32xf32>,
    %c0_63 = arith.constant 0 : index
    %c0_64 = arith.constant 0 : index
    %256 = vector.load %arg13[%c0_63, %c0_64] : memref<16x32xf32, #tpu.memory_space<vmem>>, vector<16x32xf32>
    %c0_65 = arith.constant 0 : index
    %c0_66 = arith.constant 0 : index
    %257 = vector.load %arg6[%c0_65, %c0_66] : memref<32x16xf32, #tpu.memory_space<vmem>>, vector<32x16xf32>
    %cst_67 = arith.constant dense<0.000000e+00> : vector<16x16xf32>
    %258 = tpu.matmul %256, %257, %cst_67 {dimension_numbers = #tpu.dot_dimension_numbers<[1], [0], [0], [1], [0, 0, 1, 1], [], []>} : vector<16x32xf32>, vector<32x16xf32>, vector<16x16xf32> -> vector<16x16xf32>
    %c0_68 = arith.constant 0 : index
    %c0_69 = arith.constant 0 : index
    %259 = vector.load %arg7[%c0_68, %c0_69] : memref<1x16xf32, #tpu.memory_space<vmem>>, vector<1x16xf32>
    %260 = vector.broadcast %259 : vector<1x16xf32> to vector<16x16xf32>
    %261 = arith.addf %258, %260 : vector<16x16xf32>
    %c0_70 = arith.constant 0 : index
    %c0_71 = arith.constant 0 : index
    %262 = vector.load %arg10[%c0_70, %c0_71] : memref<16x16xf32, #tpu.memory_space<vmem>>, vector<16x16xf32>
    tpu.vector_store %arg10[%c0_70, %c0_71], %261 {strides = array<i32>} : memref<16x16xf32, #tpu.memory_space<vmem>>, vector<16x16xf32>,
    return
  }
  func.func @transform_0(%arg0: i32) -> (i32, i32) {
    %c0_i32 = arith.constant 0 : i32
    %c0_i32_0 = arith.constant 0 : i32
    %c0_i32_1 = arith.constant 0 : i32
    return %c0_i32, %c0_i32_0 : i32, i32
  }
  func.func @transform_1(%arg0: i32) -> (i32, i32) {
    %c0_i32 = arith.constant 0 : i32
    %c0_i32_0 = arith.constant 0 : i32
    %c0_i32_1 = arith.constant 0 : i32
    return %c0_i32, %c0_i32_0 : i32, i32
  }
  func.func @transform_2(%arg0: i32) -> (i32, i32) {
    %c0_i32 = arith.constant 0 : i32
    %c0_i32_0 = arith.constant 0 : i32
    %c0_i32_1 = arith.constant 0 : i32
    return %c0_i32, %c0_i32_0 : i32, i32
  }
  func.func @transform_3(%arg0: i32) -> (i32, i32) {
    %c0_i32 = arith.constant 0 : i32
    %c0_i32_0 = arith.constant 0 : i32
    %c0_i32_1 = arith.constant 0 : i32
    return %c0_i32, %c0_i32_0 : i32, i32
  }
  func.func @transform_4(%arg0: i32) -> (i32, i32) {
    %c0_i32 = arith.constant 0 : i32
    %c0_i32_0 = arith.constant 0 : i32
    %c0_i32_1 = arith.constant 0 : i32
    return %c0_i32, %c0_i32_0 : i32, i32
  }
  func.func @transform_5(%arg0: i32) -> (i32, i32) {
    %c0_i32 = arith.constant 0 : i32
    %c0_i32_0 = arith.constant 0 : i32
    %c0_i32_1 = arith.constant 0 : i32
    return %c0_i32, %c0_i32_0 : i32, i32
  }
  func.func @transform_6(%arg0: i32) -> (i32, i32) {
    %c0_i32 = arith.constant 0 : i32
    %c0_i32_0 = arith.constant 0 : i32
    %c0_i32_1 = arith.constant 0 : i32
    return %c0_i32, %c0_i32_0 : i32, i32
  }
  func.func @transform_7(%arg0: i32) -> (i32, i32, i32) {
    %c0_i32 = arith.constant 0 : i32
    %c0_i32_0 = arith.constant 0 : i32
    %c0_i32_1 = arith.constant 0 : i32
    %c0_i32_2 = arith.constant 0 : i32
    return %c0_i32, %c0_i32_0, %c0_i32_1 : i32, i32, i32
  }
  func.func @transform_8(%arg0: i32) -> (i32, i32, i32) {
    %c0_i32 = arith.constant 0 : i32
    %c0_i32_0 = arith.constant 0 : i32
    %c0_i32_1 = arith.constant 0 : i32
    %c0_i32_2 = arith.constant 0 : i32
    return %c0_i32, %c0_i32_0, %c0_i32_1 : i32, i32, i32
  }
  func.func @transform_9(%arg0: i32) -> (i32, i32) {
    %c0_i32 = arith.constant 0 : i32
    %c0_i32_0 = arith.constant 0 : i32
    %c0_i32_1 = arith.constant 0 : i32
    return %c0_i32, %c0_i32_0 : i32, i32
  }
  func.func @transform_10(%arg0: i32) -> (i32, i32, i32) {
    %c0_i32 = arith.constant 0 : i32
    %c0_i32_0 = arith.constant 0 : i32
    %c0_i32_1 = arith.constant 0 : i32
    %c0_i32_2 = arith.constant 0 : i32
    return %c0_i32, %c0_i32_0, %c0_i32_1 : i32, i32, i32
  }
  func.func @transform_11(%arg0: i32) -> (i32, i32, i32) {
    %c0_i32 = arith.constant 0 : i32
    %c0_i32_0 = arith.constant 0 : i32
    %c0_i32_1 = arith.constant 0 : i32
    %c0_i32_2 = arith.constant 0 : i32
    return %c0_i32, %c0_i32_0, %c0_i32_1 : i32, i32, i32
  }
}

</mosaic_0001>

<llo_original>
// kernel: glyph_embedding_for_lm_forward.1
$region0: #{glyph_embedding_for_lm_forward.1}
  #allocation0 [shape = 'u32[]', space=smem, size = 0x4, offset = 0x4, fixed_abs, tag = 'smem constant byte address 0x4 - core index']
  #allocation1 [shape = 'u32[144,128]{1,0:T(1,128)}', space=vmem, size = 0x12000, scoped, tag = 'internal scratch']
  #allocation2 [shape = 'f32[16,32]{1,0:T(8,128)}', space=vmem, size = 0x2000, scoped, tag = 'scratch operand']
  %s0 = inlined_call_operand.vmem [shape: s32[16,1], index: 0, kind: input, shape index: {}]
  %s1 = inlined_call_operand.vmem [shape: f32[16,32], index: 1, kind: input, shape index: {}]
  %s2 = inlined_call_operand.vmem [shape: f32[32,128], index: 2, kind: input, shape index: {}]
  %s3 = inlined_call_operand.vmem [shape: f32[32,128], index: 3, kind: input, shape index: {}]
  %s4 = inlined_call_operand.vmem [shape: f32[1,128], index: 4, kind: input, shape index: {}]
  %s5 = inlined_call_operand.vmem [shape: f32[32,16], index: 5, kind: input, shape index: {}]
  %s6 = inlined_call_operand.vmem [shape: f32[1,16], index: 6, kind: input, shape index: {}]
  %s7 = inlined_call_operand.vmem [shape: f32[1,2,32], index: 7, kind: input, shape index: {}]
  %s8 = inlined_call_operand.vmem [shape: f32[1,2,32], index: 8, kind: input, shape index: {}]
  %s9 = inlined_call_operand.hbm [shape: f32[16,16], index: 9, kind: output, shape index: {0}]
  %s10 = inlined_call_operand.hbm [shape: f32[1,2,32], index: 10, kind: output, shape index: {1}]
  %s11 = inlined_call_operand.hbm [shape: f32[1,2,32], index: 11, kind: output, shape index: {2}]
  %12 = xla_tuple %s9, %s10, %s11
  %s13 = sld [smem:[#allocation0]]
  $region62: #{glyph_embedding_for_lm_forward.1} parent=0
    _
  %s15 = ssub.s32 1, %s13
  %s16 = scalar_select 0, %s15, %s13
  $region1: #{glyph_embedding_for_lm_forward.1} parent=0
    #allocation3 [shape = 'u8[8192]{0}', space=vmem, size = 0x2000, scoped, tag = 'output window, operand 0, single buffered']
    #allocation4 [shape = 's32[1]{0}', space=sflag, size = 0x4, scoped, tag = 'scoped memory for glyph_embedding_for_lm_forward.1']
    #allocation5 [shape = 'u8[1024]{0}', space=vmem, size = 0x400, scoped, tag = 'output window, operand 1, single buffered']
    #allocation6 [shape = 's32[1]{0}', space=sflag, size = 0x4, scoped, tag = 'scoped memory for glyph_embedding_for_lm_forward.1']
    #allocation7 [shape = 'u8[1024]{0}', space=vmem, size = 0x400, scoped, tag = 'output window, operand 2, single buffered']
    %17 = vsyncpa [#allocation4], 0
    %18 = vsyncpa [#allocation6], 0
    // Predicated region
    $region2: #{glyph_embedding_for_lm_forward.1} parent=1 // pred_check
      _
    $region3: #{glyph_embedding_for_lm_forward.1} parent=1 // pred_check_branch
      %20 = sbr.rel (0) target = $region5
    $region4: #{glyph_embedding_for_lm_forward.1} parent=1 // pred_region
      _
    $region5: #{glyph_embedding_for_lm_forward.1} parent=1 // pred_fallthru
      _
    // Predicated region
    $region6: #{glyph_embedding_for_lm_forward.1} parent=1 // pred_check
      _
    $region7: #{glyph_embedding_for_lm_forward.1} parent=1 // pred_check_branch
      %22 = sbr.rel (0) target = $region9
    $region8: #{glyph_embedding_for_lm_forward.1} parent=1 // pred_region
      _
    $region9: #{glyph_embedding_for_lm_forward.1} parent=1 // pred_fallthru
      _
    // Predicated region
    $region10: #{glyph_embedding_for_lm_forward.1} parent=1 // pred_check
      _
    $region11: #{glyph_embedding_for_lm_forward.1} parent=1 // pred_check_branch
      %24 = sbr.rel (0) target = $region13
    $region12: #{glyph_embedding_for_lm_forward.1} parent=1 // pred_region
      _
    $region13: #{glyph_embedding_for_lm_forward.1} parent=1 // pred_fallthru
      _
    // Predicated region
    $region14: #{glyph_embedding_for_lm_forward.1} parent=1 // pred_check
      _
    $region15: #{glyph_embedding_for_lm_forward.1} parent=1 // pred_check_branch
      %26 = sbr.rel (0) target = $region17
    $region16: #{glyph_embedding_for_lm_forward.1} parent=1 // pred_region
      _
    $region17: #{glyph_embedding_for_lm_forward.1} parent=1 // pred_fallthru
      _
    // Predicated region
    $region18: #{glyph_embedding_for_lm_forward.1} parent=1 // pred_check
      _
    $region19: #{glyph_embedding_for_lm_forward.1} parent=1 // pred_check_branch
      %28 = sbr.rel (0) target = $region21
    $region20: #{glyph_embedding_for_lm_forward.1} parent=1 // pred_region
      _
    $region21: #{glyph_embedding_for_lm_forward.1} parent=1 // pred_fallthru
      _
    // Predicated region
    $region22: #{glyph_embedding_for_lm_forward.1} parent=1 // pred_check
      _
    $region23: #{glyph_embedding_for_lm_forward.1} parent=1 // pred_check_branch
      %30 = sbr.rel (0) target = $region25
    $region24: #{glyph_embedding_for_lm_forward.1} parent=1 // pred_region
      _
    $region25: #{glyph_embedding_for_lm_forward.1} parent=1 // pred_fallthru
      _
    // Predicated region
    $region26: #{glyph_embedding_for_lm_forward.1} parent=1 // pred_check
      _
    $region27: #{glyph_embedding_for_lm_forward.1} parent=1 // pred_check_branch
      %32 = sbr.rel (0) target = $region29
    $region28: #{glyph_embedding_for_lm_forward.1} parent=1 // pred_region
      _
    $region29: #{glyph_embedding_for_lm_forward.1} parent=1 // pred_fallthru
      _
    // Predicated region
    $region30: #{glyph_embedding_for_lm_forward.1} parent=1 // pred_check
      _
    $region31: #{glyph_embedding_for_lm_forward.1} parent=1 // pred_check_branch
      %34 = sbr.rel (0) target = $region33
    $region32: #{glyph_embedding_for_lm_forward.1} parent=1 // pred_region
      _
    $region33: #{glyph_embedding_for_lm_forward.1} parent=1 // pred_fallthru
      _
    // Predicated region
    $region34: #{glyph_embedding_for_lm_forward.1} parent=1 // pred_check
      _
    $region35: #{glyph_embedding_for_lm_forward.1} parent=1 // pred_check_branch
      %36 = sbr.rel (0) target = $region37
    $region36: #{glyph_embedding_for_lm_forward.1} parent=1 // pred_region
      _
    $region37: #{glyph_embedding_for_lm_forward.1} parent=1 // pred_fallthru
      _
    %v37 = vld [vmem:[%s0] sm:$0xff]
    %v38 = vld [vmem:[%s0 + $0x8] sm:$0xff]
    %v39 = vlaneseq
    %v40 = vand.u32 %v39, 127
    %41 = vset.pattern.permute.xlu0 0
    %42 = vperm.xlu0 %41, %v37
    %v43 = vpop.permute.xlu0 %42
    %44 = vset.pattern.permute.xlu0 0
    %45 = vperm.xlu0 %44, %v38
    %v46 = vpop.permute.xlu0 %45
    %vm47 = vcmp.eq.s32.totalorder %v43, %v40
    %vm48 = vcmp.eq.s32.totalorder %v46, %v40
    %v49 = vsel %vm47, 1, 0
    %v50 = vsel %vm48, 1, 0
    %v51 = vcvt.s32.f32 %v49
    %v52 = vcvt.s32.f32 %v50
    %v53 = vld [vmem:[%s1] sm:$0xff]
    %v54 = vld [vmem:[%s1 + $0x8] sm:$0xff]
    %vm55 = vcmask 130048
    %v57 = vsel %vm55, %v51, 0
    %v60 = vsel %vm55, %v52, 0
    %62 = vmatprep.subr.mxu0 0.0
    %63 = vmatpush1.msra.mxu0 0.0
    %64 = vmatprep.subr.mxu0 0.0
    %65 = vmatpush1.msra.mxu0 0.0
    %66 = vmatprep.subr.mxu0 0.0
    %67 = vmatpush1.msra.mxu0 0.0
    %68 = vmatprep.subr.mxu0 0.0
    %69 = vmatpush1.msra.mxu0 0.0
    %70 = vmatprep.subr.mxu0 0.0
    %71 = vmatpush1.msra.mxu0 0.0
    %72 = vmatprep.subr.mxu0 0.0
    %73 = vmatpush1.msra.mxu0 0.0
    %74 = vmatprep.subr.mxu0 0.0
    %75 = vmatpush1.msra.mxu0 0.0
    %76 = vmatprep.subr.mxu0 0.0
    %77 = vmatpush1.msra.mxu0 0.0
    %78 = vmatprep.subr.mxu0 0.0
    %79 = vmatpush1.msra.mxu0 0.0
    %80 = vmatprep.subr.mxu0 0.0
    %81 = vmatpush1.msra.mxu0 0.0
    %82 = vmatprep.subr.mxu0 0.0
    %83 = vmatpush1.msra.mxu0 0.0
    %84 = vmatprep.subr.mxu0 0.0
    %85 = vmatpush1.msra.mxu0 0.0
    %86 = vmatprep.subr.mxu0 0.0
    %87 = vmatpush1.msra.mxu0 0.0
    %88 = vmatprep.subr.mxu0 0.0
    %89 = vmatpush1.msra.mxu0 0.0
    %90 = vmatprep.subr.mxu0 0.0
    %91 = vmatpush1.msra.mxu0 %v54
    %92 = vmatprep.subr.mxu0 0.0
    %93 = vmatpush1.msra.mxu0 %v53
    %94 = vmatprep.subr.mxu0 0.0
    %95 = vmatpush2.msra.mxu0 0.0
    %96 = vmatprep.subr.mxu0 0.0
    %97 = vmatpush2.msra.mxu0 0.0
    %98 = vmatprep.subr.mxu0 0.0
    %99 = vmatpush2.msra.mxu0 0.0
    %100 = vmatprep.subr.mxu0 0.0
    %101 = vmatpush2.msra.mxu0 0.0
    %102 = vmatprep.subr.mxu0 0.0
    %103 = vmatpush2.msra.mxu0 0.0
    %104 = vmatprep.subr.mxu0 0.0
    %105 = vmatpush2.msra.mxu0 0.0
    %106 = vmatprep.subr.mxu0 0.0
    %107 = vmatpush2.msra.mxu0 0.0
    %108 = vmatprep.subr.mxu0 0.0
    %109 = vmatpush2.msra.mxu0 0.0
    %110 = vmatprep.subr.mxu0 0.0
    %111 = vmatpush2.msra.mxu0 0.0
    %112 = vmatprep.subr.mxu0 0.0
    %113 = vmatpush2.msra.mxu0 0.0
    %114 = vmatprep.subr.mxu0 0.0
    %115 = vmatpush2.msra.mxu0 0.0
    %116 = vmatprep.subr.mxu0 0.0
    %117 = vmatpush2.msra.mxu0 0.0
    %118 = vmatprep.subr.mxu0 0.0
    %119 = vmatpush2.msra.mxu0 0.0
    %120 = vmatprep.subr.mxu0 0.0
    %121 = vmatpush2.msra.mxu0 0.0
    %122 = vmatprep.subr.mxu0 0.0
    %123 = vmatpush2.msra.mxu0 0.0
    %124 = vmatprep.subr.mxu0 0.0
    %125 = vmatpush2.msra.mxu0 0.0
    %126 = vmatprep.mubr.f32.mxu0 0.0
    %127 = vmatmul.mubr.f32.gmra.mxu0 %v57
    %v128 = vpop.f32.mrf.mxu0
    %v129 = vadd.f32 0.0, %v128
    %v130 = vpop.f32.mrf.mxu0
    %131 = vmatprep.mubr.f32.mxu0 0.0
    %132 = vmatmul.mubr.f32.gmra.mxu0 %v60
    %v133 = vpop.f32.mrf.mxu0
    %v134 = vadd.f32 0.0, %v133
    %v135 = vpop.f32.mrf.mxu0
    %136 = vdwg.mxu0
    %v137 = vld [vmem:[%s2] sm:$0xff]
    %v138 = vld [vmem:[%s2 + $0x8] sm:$0xff]
    %v139 = vld [vmem:[%s2 + $0x10] sm:$0xff]
    %v140 = vld [vmem:[%s2 + $0x18] sm:$0xff]
    %v141 = vld [vmem:[%s4] sm:$0x1]
    %v143 = vlaneseq
    %v144 = vshrl.u32 %v143, 7
    %v145 = vsub.s32 0, %v144
    %v146 = vrot.slane %v141, %v145
    %vm148 = vcmask 261120
    %v150 = vsel %vm148, %v129, 0
    %v153 = vsel %vm148, %v134, 0
    %155 = vmatprep.subr.mxu0 0.0
    %156 = vmatpush1.msra.mxu0 0.0
    %157 = vmatprep.subr.mxu0 0.0
    %158 = vmatpush1.msra.mxu0 0.0
    %159 = vmatprep.subr.mxu0 0.0
    %160 = vmatpush1.msra.mxu0 0.0
    %161 = vmatprep.subr.mxu0 0.0
    %162 = vmatpush1.msra.mxu0 0.0
    %163 = vmatprep.subr.mxu0 0.0
    %164 = vmatpush1.msra.mxu0 0.0
    %165 = vmatprep.subr.mxu0 0.0
    %166 = vmatpush1.msra.mxu0 0.0
    %167 = vmatprep.subr.mxu0 0.0
    %168 = vmatpush1.msra.mxu0 0.0
    %169 = vmatprep.subr.mxu0 0.0
    %170 = vmatpush1.msra.mxu0 0.0
    %171 = vmatprep.subr.mxu0 0.0
    %172 = vmatpush1.msra.mxu0 0.0
    %173 = vmatprep.subr.mxu0 0.0
    %174 = vmatpush1.msra.mxu0 0.0
    %175 = vmatprep.subr.mxu0 0.0
    %176 = vmatpush1.msra.mxu0 0.0
    %177 = vmatprep.subr.mxu0 0.0
    %178 = vmatpush1.msra.mxu0 0.0
    %179 = vmatprep.subr.mxu0 0.0
    %180 = vmatpush1.msra.mxu0 %v140
    %181 = vmatprep.subr.mxu0 0.0
    %182 = vmatpush1.msra.mxu0 %v139
    %183 = vmatprep.subr.mxu0 0.0
    %184 = vmatpush1.msra.mxu0 %v138
    %185 = vmatprep.subr.mxu0 0.0
    %186 = vmatpush1.msra.mxu0 %v137
    %187 = vmatprep.subr.mxu0 0.0
    %188 = vmatpush2.msra.mxu0 0.0
    %189 = vmatprep.subr.mxu0 0.0
    %190 = vmatpush2.msra.mxu0 0.0
    %191 = vmatprep.subr.mxu0 0.0
    %192 = vmatpush2.msra.mxu0 0.0
    %193 = vmatprep.subr.mxu0 0.0
    %194 = vmatpush2.msra.mxu0 0.0
    %195 = vmatprep.subr.mxu0 0.0
    %196 = vmatpush2.msra.mxu0 0.0
    %197 = vmatprep.subr.mxu0 0.0
    %198 = vmatpush2.msra.mxu0 0.0
    %199 = vmatprep.subr.mxu0 0.0
    %200 = vmatpush2.msra.mxu0 0.0
    %201 = vmatprep.subr.mxu0 0.0
    %202 = vmatpush2.msra.mxu0 0.0
    %203 = vmatprep.subr.mxu0 0.0
    %204 = vmatpush2.msra.mxu0 0.0
    %205 = vmatprep.subr.mxu0 0.0
    %206 = vmatpush2.msra.mxu0 0.0
    %207 = vmatprep.subr.mxu0 0.0
    %208 = vmatpush2.msra.mxu0 0.0
    %209 = vmatprep.subr.mxu0 0.0
    %210 = vmatpush2.msra.mxu0 0.0
    %211 = vmatprep.subr.mxu0 0.0
    %212 = vmatpush2.msra.mxu0 0.0
    %213 = vmatprep.subr.mxu0 0.0
    %214 = vmatpush2.msra.mxu0 0.0
    %215 = vmatprep.subr.mxu0 0.0
    %216 = vmatpush2.msra.mxu0 0.0
    %217 = vmatprep.subr.mxu0 0.0
    %218 = vmatpush2.msra.mxu0 0.0
    %219 = vmatprep.mubr.f32.mxu0 0.0
    %220 = vmatmul.mubr.f32.gmra.mxu0 %v150
    %v221 = vpop.f32.mrf.mxu0
    %v222 = vadd.f32 %v146, %v221
    %v223 = vpop.f32.mrf.mxu0
    %224 = vmatprep.mubr.f32.mxu0 0.0
    %225 = vmatmul.mubr.f32.gmra.mxu0 %v153
    %v226 = vpop.f32.mrf.mxu0
    %v227 = vadd.f32 %v146, %v226
    %v228 = vpop.f32.mrf.mxu0
    %229 = vdwg.mxu0
    %v230 = vld [vmem:[%s3] sm:$0xff]
    %v231 = vld [vmem:[%s3 + $0x8] sm:$0xff]
    %v232 = vld [vmem:[%s3 + $0x10] sm:$0xff]
    %v233 = vld [vmem:[%s3 + $0x18] sm:$0xff]
    %v234 = vld [vmem:[%s7] sm:$0x3]
    %v235 = vld [vmem:[%s8] sm:$0x3]
    %v237 = vsel %vm148, %v234, 0
    %239 = vmatprep.subr.mxu0 0.0
    %240 = vmatpush1.msra.mxu0 0.0
    %241 = vmatprep.subr.mxu0 0.0
    %242 = vmatpush1.msra.mxu0 0.0
    %243 = vmatprep.subr.mxu0 0.0
    %244 = vmatpush1.msra.mxu0 0.0
    %245 = vmatprep.subr.mxu0 0.0
    %246 = vmatpush1.msra.mxu0 0.0
    %247 = vmatprep.subr.mxu0 0.0
    %248 = vmatpush1.msra.mxu0 0.0
    %249 = vmatprep.subr.mxu0 0.0
    %250 = vmatpush1.msra.mxu0 0.0
    %251 = vmatprep.subr.mxu0 0.0
    %252 = vmatpush1.msra.mxu0 0.0
    %253 = vmatprep.subr.mxu0 0.0
    %254 = vmatpush1.msra.mxu0 0.0
    %255 = vmatprep.subr.mxu0 0.0
    %256 = vmatpush1.msra.mxu0 0.0
    %257 = vmatprep.subr.mxu0 0.0
    %258 = vmatpush1.msra.mxu0 0.0
    %259 = vmatprep.subr.mxu0 0.0
    %260 = vmatpush1.msra.mxu0 0.0
    %261 = vmatprep.subr.mxu0 0.0
    %262 = vmatpush1.msra.mxu0 0.0
    %263 = vmatprep.subr.mxu0 0.0
    %264 = vmatpush1.msra.mxu0 %v233
    %265 = vmatprep.subr.mxu0 0.0
    %266 = vmatpush1.msra.mxu0 %v232
    %267 = vmatprep.subr.mxu0 0.0
    %268 = vmatpush1.msra.mxu0 %v231
    %269 = vmatprep.subr.mxu0 0.0
    %270 = vmatpush1.msra.mxu0 %v230
    %271 = vmatprep.subr.mxu0 0.0
    %272 = vmatpush2.msra.mxu0 0.0
    %273 = vmatprep.subr.mxu0 0.0
    %274 = vmatpush2.msra.mxu0 0.0
    %275 = vmatprep.subr.mxu0 0.0
    %276 = vmatpush2.msra.mxu0 0.0
    %277 = vmatprep.subr.mxu0 0.0
    %278 = vmatpush2.msra.mxu0 0.0
    %279 = vmatprep.subr.mxu0 0.0
    %280 = vmatpush2.msra.mxu0 0.0
    %281 = vmatprep.subr.mxu0 0.0
    %282 = vmatpush2.msra.mxu0 0.0
    %283 = vmatprep.subr.mxu0 0.0
    %284 = vmatpush2.msra.mxu0 0.0
    %285 = vmatprep.subr.mxu0 0.0
    %286 = vmatpush2.msra.mxu0 0.0
    %287 = vmatprep.subr.mxu0 0.0
    %288 = vmatpush2.msra.mxu0 0.0
    %289 = vmatprep.subr.mxu0 0.0
    %290 = vmatpush2.msra.mxu0 0.0
    %291 = vmatprep.subr.mxu0 0.0
    %292 = vmatpush2.msra.mxu0 0.0
    %293 = vmatprep.subr.mxu0 0.0
    %294 = vmatpush2.msra.mxu0 0.0
    %295 = vmatprep.subr.mxu0 0.0
    %296 = vmatpush2.msra.mxu0 0.0
    %297 = vmatprep.subr.mxu0 0.0
    %298 = vmatpush2.msra.mxu0 0.0
    %299 = vmatprep.subr.mxu0 0.0
    %300 = vmatpush2.msra.mxu0 0.0
    %301 = vmatprep.subr.mxu0 0.0
    %302 = vmatpush2.msra.mxu0 0.0
    %303 = vmatprep.mubr.f32.mxu0 0.0
    %304 = vmatmul.mubr.f32.gmra.mxu0 %v237
    %v305 = vpop.f32.mrf.mxu0
    %v306 = vadd.f32 0.0, %v305
    %v307 = vpop.f32.mrf.mxu0
    %308 = vdwg.mxu0
    %v309 = vadd.f32 %v222, %v306
    %v310 = vxor.u32 %v309, 2147483648
    %v311 = vmul.f32 %v310, 1.442695
    %v312 = vpow.pop %v311
    %v313 = vadd.f32 %v312, 1.0
    %v314 = vrcp.pop %v313
    %v315 = vmul.f32 1.0, %v314
    %v316 = vtanh.pop %v309
    %318 = vrot.lane.b32.xlu0 %v235, 32
    %v319 = vpop.permute.xlu0 %318
    %v321 = vmul.f32 %v315, %v319
    %323 = vrot.lane.b32.xlu0 %v316, 64
    %v324 = vpop.permute.xlu0 %323
    %v326 = vmul.f32 %v315, %v324
    %328 = vrot.lane.b32.xlu0 %v326, 32
    %v329 = vpop.permute.xlu0 %328
    %v331 = vadd.f32 %v321, %v329
    %v332 = vtanh.pop %v331
    %334 = vrot.lane.b32.xlu0 %v332, 64
    %v335 = vpop.permute.xlu0 %334
    %v337 = vmul.f32 %v315, %v335
    %339 = vrot.lane.b32.xlu0 %v337, 32
    %v340 = vpop.permute.xlu0 %339
    %vm342 = vcmask 254976
    %343 = vst.msk [vmem:[#allocation2] sm:$0x3] %vm342, %v340
    %v344 = vsel %vm148, %v340, 0
    %346 = vmatprep.subr.mxu0 0.0
    %347 = vmatpush1.msra.mxu0 0.0
    %348 = vmatprep.subr.mxu0 0.0
    %349 = vmatpush1.msra.mxu0 0.0
    %350 = vmatprep.subr.mxu0 0.0
    %351 = vmatpush1.msra.mxu0 0.0
    %352 = vmatprep.subr.mxu0 0.0
    %353 = vmatpush1.msra.mxu0 0.0
    %354 = vmatprep.subr.mxu0 0.0
    %355 = vmatpush1.msra.mxu0 0.0
    %356 = vmatprep.subr.mxu0 0.0
    %357 = vmatpush1.msra.mxu0 0.0
    %358 = vmatprep.subr.mxu0 0.0
    %359 = vmatpush1.msra.mxu0 0.0
    %360 = vmatprep.subr.mxu0 0.0
    %361 = vmatpush1.msra.mxu0 0.0
    %362 = vmatprep.subr.mxu0 0.0
    %363 = vmatpush1.msra.mxu0 0.0
    %364 = vmatprep.subr.mxu0 0.0
    %365 = vmatpush1.msra.mxu0 0.0
    %366 = vmatprep.subr.mxu0 0.0
    %367 = vmatpush1.msra.mxu0 0.0
    %368 = vmatprep.subr.mxu0 0.0
    %369 = vmatpush1.msra.mxu0 0.0
    %370 = vmatprep.subr.mxu0 0.0
    %371 = vmatpush1.msra.mxu0 %v233
    %372 = vmatprep.subr.mxu0 0.0
    %373 = vmatpush1.msra.mxu0 %v232
    %374 = vmatprep.subr.mxu0 0.0
    %375 = vmatpush1.msra.mxu0 %v231
    %376 = vmatprep.subr.mxu0 0.0
    %377 = vmatpush1.msra.mxu0 %v230
    %378 = vmatprep.subr.mxu0 0.0
    %379 = vmatpush2.msra.mxu0 0.0
    %380 = vmatprep.subr.mxu0 0.0
    %381 = vmatpush2.msra.mxu0 0.0
    %382 = vmatprep.subr.mxu0 0.0
    %383 = vmatpush2.msra.mxu0 0.0
    %384 = vmatprep.subr.mxu0 0.0
    %385 = vmatpush2.msra.mxu0 0.0
    %386 = vmatprep.subr.mxu0 0.0
    %387 = vmatpush2.msra.mxu0 0.0
    %388 = vmatprep.subr.mxu0 0.0
    %389 = vmatpush2.msra.mxu0 0.0
    %390 = vmatprep.subr.mxu0 0.0
    %391 = vmatpush2.msra.mxu0 0.0
    %392 = vmatprep.subr.mxu0 0.0
    %393 = vmatpush2.msra.mxu0 0.0
    %394 = vmatprep.subr.mxu0 0.0
    %395 = vmatpush2.msra.mxu0 0.0
    %396 = vmatprep.subr.mxu0 0.0
    %397 = vmatpush2.msra.mxu0 0.0
    %398 = vmatprep.subr.mxu0 0.0
    %399 = vmatpush2.msra.mxu0 0.0
    %400 = vmatprep.subr.mxu0 0.0
    %401 = vmatpush2.msra.mxu0 0.0
    %402 = vmatprep.subr.mxu0 0.0
    %403 = vmatpush2.msra.mxu0 0.0
    %404 = vmatprep.subr.mxu0 0.0
    %405 = vmatpush2.msra.mxu0 0.0
    %406 = vmatprep.subr.mxu0 0.0
    %407 = vmatpush2.msra.mxu0 0.0
    %408 = vmatprep.subr.mxu0 0.0
    %409 = vmatpush2.msra.mxu0 0.0
    %410 = vmatprep.mubr.f32.mxu0 0.0
    %411 = vmatmul.mubr.f32.gmra.mxu0 %v344
    %v412 = vpop.f32.mrf.mxu0
    %v413 = vadd.f32 0.0, %v412
    %v414 = vpop.f32.mrf.mxu0
    %415 = vdwg.mxu0
    %v417 = vrot.slane %v413, 6
    %v419 = vadd.f32 %v222, %v417
    %v420 = vxor.u32 %v419, 2147483648
    %v421 = vmul.f32 %v420, 1.442695
    %v422 = vpow.pop %v421
    %v423 = vadd.f32 %v422, 1.0
    %v424 = vrcp.pop %v423
    %v425 = vmul.f32 1.0, %v424
    %v426 = vtanh.pop %v419
    %v428 = vrot.slane %v331, 6
    %v430 = vmul.f32 %v425, %v428
    %432 = vrot.lane.b32.xlu0 %v426, 64
    %v433 = vpop.permute.xlu0 %432
    %v435 = vmul.f32 %v425, %v433
    %437 = vrot.lane.b32.xlu0 %v435, 32
    %v438 = vpop.permute.xlu0 %437
    %v440 = vadd.f32 %v430, %v438
    %v441 = vtanh.pop %v440
    %443 = vrot.lane.b32.xlu0 %v441, 64
    %v444 = vpop.permute.xlu0 %443
    %v446 = vmul.f32 %v425, %v444
    %448 = vrot.lane.b32.xlu0 %v446, 32
    %v449 = vpop.permute.xlu0 %448
    %vm451 = vcmask 257026
    %452 = vst.msk [vmem:[#allocation2] sm:$0xc] %vm451, %v449
    %v453 = vrot.slane %v446, 2
    %454 = vrot.lane.b32.xlu0 %v453, 32
    %v455 = vpop.permute.xlu0 %454
    %v456 = vsel %vm148, %v455, 0
    %458 = vmatprep.subr.mxu0 0.0
    %459 = vmatpush1.msra.mxu0 0.0
    %460 = vmatprep.subr.mxu0 0.0
    %461 = vmatpush1.msra.mxu0 0.0
    %462 = vmatprep.subr.mxu0 0.0
    %463 = vmatpush1.msra.mxu0 0.0
    %464 = vmatprep.subr.mxu0 0.0
    %465 = vmatpush1.msra.mxu0 0.0
    %466 = vmatprep.subr.mxu0 0.0
    %467 = vmatpush1.msra.mxu0 0.0
    %468 = vmatprep.subr.mxu0 0.0
    %469 = vmatpush1.msra.mxu0 0.0
    %470 = vmatprep.subr.mxu0 0.0
    %471 = vmatpush1.msra.mxu0 0.0
    %472 = vmatprep.subr.mxu0 0.0
    %473 = vmatpush1.msra.mxu0 0.0
    %474 = vmatprep.subr.mxu0 0.0
    %475 = vmatpush1.msra.mxu0 0.0
    %476 = vmatprep.subr.mxu0 0.0
    %477 = vmatpush1.msra.mxu0 0.0
    %478 = vmatprep.subr.mxu0 0.0
    %479 = vmatpush1.msra.mxu0 0.0
    %480 = vmatprep.subr.mxu0 0.0
    %481 = vmatpush1.msra.mxu0 0.0
    %482 = vmatprep.subr.mxu0 0.0
    %483 = vmatpush1.msra.mxu0 %v233
    %484 = vmatprep.subr.mxu0 0.0
    %485 = vmatpush1.msra.mxu0 %v232
    %486 = vmatprep.subr.mxu0 0.0
    %487 = vmatpush1.msra.mxu0 %v231
    %488 = vmatprep.subr.mxu0 0.0
    %489 = vmatpush1.msra.mxu0 %v230
    %490 = vmatprep.subr.mxu0 0.0
    %491 = vmatpush2.msra.mxu0 0.0
    %492 = vmatprep.subr.mxu0 0.0
    %493 = vmatpush2.msra.mxu0 0.0
    %494 = vmatprep.subr.mxu0 0.0
    %495 = vmatpush2.msra.mxu0 0.0
    %496 = vmatprep.subr.mxu0 0.0
    %497 = vmatpush2.msra.mxu0 0.0
    %498 = vmatprep.subr.mxu0 0.0
    %499 = vmatpush2.msra.mxu0 0.0
    %500 = vmatprep.subr.mxu0 0.0
    %501 = vmatpush2.msra.mxu0 0.0
    %502 = vmatprep.subr.mxu0 0.0
    %503 = vmatpush2.msra.mxu0 0.0
    %504 = vmatprep.subr.mxu0 0.0
    %505 = vmatpush2.msra.mxu0 0.0
    %506 = vmatprep.subr.mxu0 0.0
    %507 = vmatpush2.msra.mxu0 0.0
    %508 = vmatprep.subr.mxu0 0.0
    %509 = vmatpush2.msra.mxu0 0.0
    %510 = vmatprep.subr.mxu0 0.0
    %511 = vmatpush2.msra.mxu0 0.0
    %512 = vmatprep.subr.mxu0 0.0
    %513 = vmatpush2.msra.mxu0 0.0
    %514 = vmatprep.subr.mxu0 0.0
    %515 = vmatpush2.msra.mxu0 0.0
    %516 = vmatprep.subr.mxu0 0.0
    %517 = vmatpush2.msra.mxu0 0.0
    %518 = vmatprep.subr.mxu0 0.0
    %519 = vmatpush2.msra.mxu0 0.0
    %520 = vmatprep.subr.mxu0 0.0
    %521 = vmatpush2.msra.mxu0 0.0
    %522 = vmatprep.mubr.f32.mxu0 0.0
    %523 = vmatmul.mubr.f32.gmra.mxu0 %v456
    %v524 = vpop.f32.mrf.mxu0
    %v525 = vadd.f32 0.0, %v524
    %v526 = vpop.f32.mrf.mxu0
    %527 = vdwg.mxu0
    %v529 = vrot.slane %v525, 4
    %v531 = vadd.f32 %v222, %v529
    %v532 = vxor.u32 %v531, 2147483648
    %v533 = vmul.f32 %v532, 1.442695
    %v534 = vpow.pop %v533
    %v535 = vadd.f32 %v534, 1.0
    %v536 = vrcp.pop %v535
    %v537 = vmul.f32 1.0, %v536
    %v538 = vtanh.pop %v531
    %v540 = vrot.slane %v440, 6
    %v542 = vmul.f32 %v537, %v540
    %544 = vrot.lane.b32.xlu0 %v538, 64
    %v545 = vpop.permute.xlu0 %544
    %v547 = vmul.f32 %v537, %v545
    %549 = vrot.lane.b32.xlu0 %v547, 32
    %v550 = vpop.permute.xlu0 %549
    %v552 = vadd.f32 %v542, %v550
    %v553 = vtanh.pop %v552
    %555 = vrot.lane.b32.xlu0 %v553, 64
    %v556 = vpop.permute.xlu0 %555
    %v558 = vmul.f32 %v537, %v556
    %560 = vrot.lane.b32.xlu0 %v558, 32
    %v561 = vpop.permute.xlu0 %560
    %vm563 = vcmask 259076
    %564 = vst.msk [vmem:[#allocation2] sm:$0x30] %vm563, %v561
    %v565 = vrot.slane %v558, 4
    %566 = vrot.lane.b32.xlu0 %v565, 32
    %v567 = vpop.permute.xlu0 %566
    %v568 = vsel %vm148, %v567, 0
    %570 = vmatprep.subr.mxu0 0.0
    %571 = vmatpush1.msra.mxu0 0.0
    %572 = vmatprep.subr.mxu0 0.0
    %573 = vmatpush1.msra.mxu0 0.0
    %574 = vmatprep.subr.mxu0 0.0
    %575 = vmatpush1.msra.mxu0 0.0
    %576 = vmatprep.subr.mxu0 0.0
    %577 = vmatpush1.msra.mxu0 0.0
    %578 = vmatprep.subr.mxu0 0.0
    %579 = vmatpush1.msra.mxu0 0.0
    %580 = vmatprep.subr.mxu0 0.0
    %581 = vmatpush1.msra.mxu0 0.0
    %582 = vmatprep.subr.mxu0 0.0
    %583 = vmatpush1.msra.mxu0 0.0
    %584 = vmatprep.subr.mxu0 0.0
    %585 = vmatpush1.msra.mxu0 0.0
    %586 = vmatprep.subr.mxu0 0.0
    %587 = vmatpush1.msra.mxu0 0.0
    %588 = vmatprep.subr.mxu0 0.0
    %589 = vmatpush1.msra.mxu0 0.0
    %590 = vmatprep.subr.mxu0 0.0
    %591 = vmatpush1.msra.mxu0 0.0
    %592 = vmatprep.subr.mxu0 0.0
    %593 = vmatpush1.msra.mxu0 0.0
    %594 = vmatprep.subr.mxu0 0.0
    %595 = vmatpush1.msra.mxu0 %v233
    %596 = vmatprep.subr.mxu0 0.0
    %597 = vmatpush1.msra.mxu0 %v232
    %598 = vmatprep.subr.mxu0 0.0
    %599 = vmatpush1.msra.mxu0 %v231
    %600 = vmatprep.subr.mxu0 0.0
    %601 = vmatpush1.msra.mxu0 %v230
    %602 = vmatprep.subr.mxu0 0.0
    %603 = vmatpush2.msra.mxu0 0.0
    %604 = vmatprep.subr.mxu0 0.0
    %605 = vmatpush2.msra.mxu0 0.0
    %606 = vmatprep.subr.mxu0 0.0
    %607 = vmatpush2.msra.mxu0 0.0
    %608 = vmatprep.subr.mxu0 0.0
    %609 = vmatpush2.msra.mxu0 0.0
    %610 = vmatprep.subr.mxu0 0.0
    %611 = vmatpush2.msra.mxu0 0.0
    %612 = vmatprep.subr.mxu0 0.0
    %613 = vmatpush2.msra.mxu0 0.0
    %614 = vmatprep.subr.mxu0 0.0
    %615 = vmatpush2.msra.mxu0 0.0
    %616 = vmatprep.subr.mxu0 0.0
    %617 = vmatpush2.msra.mxu0 0.0
    %618 = vmatprep.subr.mxu0 0.0
    %619 = vmatpush2.msra.mxu0 0.0
    %620 = vmatprep.subr.mxu0 0.0
    %621 = vmatpush2.msra.mxu0 0.0
    %622 = vmatprep.subr.mxu0 0.0
    %623 = vmatpush2.msra.mxu0 0.0
    %624 = vmatprep.subr.mxu0 0.0
    %625 = vmatpush2.msra.mxu0 0.0
    %626 = vmatprep.subr.mxu0 0.0
    %627 = vmatpush2.msra.mxu0 0.0
    %628 = vmatprep.subr.mxu0 0.0
    %629 = vmatpush2.msra.mxu0 0.0
    %630 = vmatprep.subr.mxu0 0.0
    %631 = vmatpush2.msra.mxu0 0.0
    %632 = vmatprep.subr.mxu0 0.0
    %633 = vmatpush2.msra.mxu0 0.0
    %634 = vmatprep.mubr.f32.mxu0 0.0
    %635 = vmatmul.mubr.f32.gmra.mxu0 %v568
    %v636 = vpop.f32.mrf.mxu0
    %v637 = vadd.f32 0.0, %v636
    %v638 = vpop.f32.mrf.mxu0
    %639 = vdwg.mxu0
    %v641 = vrot.slane %v637, 2
    %v643 = vadd.f32 %v222, %v641
    %v644 = vxor.u32 %v643, 2147483648
    %v645 = vmul.f32 %v644, 1.442695
    %v646 = vpow.pop %v645
    %v647 = vadd.f32 %v646, 1.0
    %v648 = vrcp.pop %v647
    %v649 = vmul.f32 1.0, %v648
    %v650 = vtanh.pop %v643
    %v652 = vrot.slane %v552, 6
    %v654 = vmul.f32 %v649, %v652
    %656 = vrot.lane.b32.xlu0 %v650, 64
    %v657 = vpop.permute.xlu0 %656
    %v659 = vmul.f32 %v649, %v657
    %661 = vrot.lane.b32.xlu0 %v659, 32
    %v662 = vpop.permute.xlu0 %661
    %v664 = vadd.f32 %v654, %v662
    %v665 = vtanh.pop %v664
    %667 = vrot.lane.b32.xlu0 %v665, 64
    %v668 = vpop.permute.xlu0 %667
    %v670 = vmul.f32 %v649, %v668
    %672 = vrot.lane.b32.xlu0 %v670, 32
    %v673 = vpop.permute.xlu0 %672
    %vm675 = vcmask 261126
    %676 = vst.msk [vmem:[#allocation2] sm:$0xc0] %vm675, %v673
    %v677 = vrot.slane %v670, 6
    %678 = vrot.lane.b32.xlu0 %v677, 32
    %v679 = vpop.permute.xlu0 %678
    %v680 = vsel %vm148, %v679, 0
    %682 = vmatprep.subr.mxu0 0.0
    %683 = vmatpush1.msra.mxu0 0.0
    %684 = vmatprep.subr.mxu0 0.0
    %685 = vmatpush1.msra.mxu0 0.0
    %686 = vmatprep.subr.mxu0 0.0
    %687 = vmatpush1.msra.mxu0 0.0
    %688 = vmatprep.subr.mxu0 0.0
    %689 = vmatpush1.msra.mxu0 0.0
    %690 = vmatprep.subr.mxu0 0.0
    %691 = vmatpush1.msra.mxu0 0.0
    %692 = vmatprep.subr.mxu0 0.0
    %693 = vmatpush1.msra.mxu0 0.0
    %694 = vmatprep.subr.mxu0 0.0
    %695 = vmatpush1.msra.mxu0 0.0
    %696 = vmatprep.subr.mxu0 0.0
    %697 = vmatpush1.msra.mxu0 0.0
    %698 = vmatprep.subr.mxu0 0.0
    %699 = vmatpush1.msra.mxu0 0.0
    %700 = vmatprep.subr.mxu0 0.0
    %701 = vmatpush1.msra.mxu0 0.0
    %702 = vmatprep.subr.mxu0 0.0
    %703 = vmatpush1.msra.mxu0 0.0
    %704 = vmatprep.subr.mxu0 0.0
    %705 = vmatpush1.msra.mxu0 0.0
    %706 = vmatprep.subr.mxu0 0.0
    %707 = vmatpush1.msra.mxu0 %v233
    %708 = vmatprep.subr.mxu0 0.0
    %709 = vmatpush1.msra.mxu0 %v232
    %710 = vmatprep.subr.mxu0 0.0
    %711 = vmatpush1.msra.mxu0 %v231
    %712 = vmatprep.subr.mxu0 0.0
    %713 = vmatpush1.msra.mxu0 %v230
    %714 = vmatprep.subr.mxu0 0.0
    %715 = vmatpush2.msra.mxu0 0.0
    %716 = vmatprep.subr.mxu0 0.0
    %717 = vmatpush2.msra.mxu0 0.0
    %718 = vmatprep.subr.mxu0 0.0
    %719 = vmatpush2.msra.mxu0 0.0
    %720 = vmatprep.subr.mxu0 0.0
    %721 = vmatpush2.msra.mxu0 0.0
    %722 = vmatprep.subr.mxu0 0.0
    %723 = vmatpush2.msra.mxu0 0.0
    %724 = vmatprep.subr.mxu0 0.0
    %725 = vmatpush2.msra.mxu0 0.0
    %726 = vmatprep.subr.mxu0 0.0
    %727 = vmatpush2.msra.mxu0 0.0
    %728 = vmatprep.subr.mxu0 0.0
    %729 = vmatpush2.msra.mxu0 0.0
    %730 = vmatprep.subr.mxu0 0.0
    %731 = vmatpush2.msra.mxu0 0.0
    %732 = vmatprep.subr.mxu0 0.0
    %733 = vmatpush2.msra.mxu0 0.0
    %734 = vmatprep.subr.mxu0 0.0
    %735 = vmatpush2.msra.mxu0 0.0
    %736 = vmatprep.subr.mxu0 0.0
    %737 = vmatpush2.msra.mxu0 0.0
    %738 = vmatprep.subr.mxu0 0.0
    %739 = vmatpush2.msra.mxu0 0.0
    %740 = vmatprep.subr.mxu0 0.0
    %741 = vmatpush2.msra.mxu0 0.0
    %742 = vmatprep.subr.mxu0 0.0
    %743 = vmatpush2.msra.mxu0 0.0
    %744 = vmatprep.subr.mxu0 0.0
    %745 = vmatpush2.msra.mxu0 0.0
    %746 = vmatprep.mubr.f32.mxu0 0.0
    %747 = vmatmul.mubr.f32.gmra.mxu0 %v680
    %v748 = vpop.f32.mrf.mxu0
    %v749 = vadd.f32 0.0, %v748
    %v750 = vpop.f32.mrf.mxu0
    %751 = vdwg.mxu0
    %v752 = vadd.f32 %v227, %v749
    %v753 = vxor.u32 %v752, 2147483648
    %v754 = vmul.f32 %v753, 1.442695
    %v755 = vpow.pop %v754
    %v756 = vadd.f32 %v755, 1.0
    %v757 = vrcp.pop %v756
    %v758 = vmul.f32 1.0, %v757
    %v759 = vtanh.pop %v752
    %v761 = vrot.slane %v664, 6
    %v763 = vmul.f32 %v758, %v761
    %765 = vrot.lane.b32.xlu0 %v759, 64
    %v766 = vpop.permute.xlu0 %765
    %v768 = vmul.f32 %v758, %v766
    %770 = vrot.lane.b32.xlu0 %v768, 32
    %v771 = vpop.permute.xlu0 %770
    %v773 = vadd.f32 %v763, %v771
    %v774 = vtanh.pop %v773
    %776 = vrot.lane.b32.xlu0 %v774, 64
    %v777 = vpop.permute.xlu0 %776
    %v779 = vmul.f32 %v758, %v777
    %781 = vrot.lane.b32.xlu0 %v779, 32
    %v782 = vpop.permute.xlu0 %781
    %784 = vst.msk [vmem:[#allocation2 + $0x8] sm:$0x3] %vm342, %v782
    %v785 = vsel %vm148, %v782, 0
    %787 = vmatprep.subr.mxu0 0.0
    %788 = vmatpush1.msra.mxu0 0.0
    %789 = vmatprep.subr.mxu0 0.0
    %790 = vmatpush1.msra.mxu0 0.0
    %791 = vmatprep.subr.mxu0 0.0
    %792 = vmatpush1.msra.mxu0 0.0
    %793 = vmatprep.subr.mxu0 0.0
    %794 = vmatpush1.msra.mxu0 0.0
    %795 = vmatprep.subr.mxu0 0.0
    %796 = vmatpush1.msra.mxu0 0.0
    %797 = vmatprep.subr.mxu0 0.0
    %798 = vmatpush1.msra.mxu0 0.0
    %799 = vmatprep.subr.mxu0 0.0
    %800 = vmatpush1.msra.mxu0 0.0
    %801 = vmatprep.subr.mxu0 0.0
    %802 = vmatpush1.msra.mxu0 0.0
    %803 = vmatprep.subr.mxu0 0.0
    %804 = vmatpush1.msra.mxu0 0.0
    %805 = vmatprep.subr.mxu0 0.0
    %806 = vmatpush1.msra.mxu0 0.0
    %807 = vmatprep.subr.mxu0 0.0
    %808 = vmatpush1.msra.mxu0 0.0
    %809 = vmatprep.subr.mxu0 0.0
    %810 = vmatpush1.msra.mxu0 0.0
    %811 = vmatprep.subr.mxu0 0.0
    %812 = vmatpush1.msra.mxu0 %v233
    %813 = vmatprep.subr.mxu0 0.0
    %814 = vmatpush1.msra.mxu0 %v232
    %815 = vmatprep.subr.mxu0 0.0
    %816 = vmatpush1.msra.mxu0 %v231
    %817 = vmatprep.subr.mxu0 0.0
    %818 = vmatpush1.msra.mxu0 %v230
    %819 = vmatprep.subr.mxu0 0.0
    %820 = vmatpush2.msra.mxu0 0.0
    %821 = vmatprep.subr.mxu0 0.0
    %822 = vmatpush2.msra.mxu0 0.0
    %823 = vmatprep.subr.mxu0 0.0
    %824 = vmatpush2.msra.mxu0 0.0
    %825 = vmatprep.subr.mxu0 0.0
    %826 = vmatpush2.msra.mxu0 0.0
    %827 = vmatprep.subr.mxu0 0.0
    %828 = vmatpush2.msra.mxu0 0.0
    %829 = vmatprep.subr.mxu0 0.0
    %830 = vmatpush2.msra.mxu0 0.0
    %831 = vmatprep.subr.mxu0 0.0
    %832 = vmatpush2.msra.mxu0 0.0
    %833 = vmatprep.subr.mxu0 0.0
    %834 = vmatpush2.msra.mxu0 0.0
    %835 = vmatprep.subr.mxu0 0.0
    %836 = vmatpush2.msra.mxu0 0.0
    %837 = vmatprep.subr.mxu0 0.0
    %838 = vmatpush2.msra.mxu0 0.0
    %839 = vmatprep.subr.mxu0 0.0
    %840 = vmatpush2.msra.mxu0 0.0
    %841 = vmatprep.subr.mxu0 0.0
    %842 = vmatpush2.msra.mxu0 0.0
    %843 = vmatprep.subr.mxu0 0.0
    %844 = vmatpush2.msra.mxu0 0.0
    %845 = vmatprep.subr.mxu0 0.0
    %846 = vmatpush2.msra.mxu0 0.0
    %847 = vmatprep.subr.mxu0 0.0
    %848 = vmatpush2.msra.mxu0 0.0
    %849 = vmatprep.subr.mxu0 0.0
    %850 = vmatpush2.msra.mxu0 0.0
    %851 = vmatprep.mubr.f32.mxu0 0.0
    %852 = vmatmul.mubr.f32.gmra.mxu0 %v785
    %v853 = vpop.f32.mrf.mxu0
    %v854 = vadd.f32 0.0, %v853
    %v855 = vpop.f32.mrf.mxu0
    %856 = vdwg.mxu0
    %v858 = vrot.slane %v854, 6
    %v860 = vadd.f32 %v227, %v858
    %v861 = vxor.u32 %v860, 2147483648
    %v862 = vmul.f32 %v861, 1.442695
    %v863 = vpow.pop %v862
    %v864 = vadd.f32 %v863, 1.0
    %v865 = vrcp.pop %v864
    %v866 = vmul.f32 1.0, %v865
    %v867 = vtanh.pop %v860
    %v869 = vrot.slane %v773, 6
    %v871 = vmul.f32 %v866, %v869
    %873 = vrot.lane.b32.xlu0 %v867, 64
    %v874 = vpop.permute.xlu0 %873
    %v876 = vmul.f32 %v866, %v874
    %878 = vrot.lane.b32.xlu0 %v876, 32
    %v879 = vpop.permute.xlu0 %878
    %v881 = vadd.f32 %v871, %v879
    %v882 = vtanh.pop %v881
    %884 = vrot.lane.b32.xlu0 %v882, 64
    %v885 = vpop.permute.xlu0 %884
    %v887 = vmul.f32 %v866, %v885
    %889 = vrot.lane.b32.xlu0 %v887, 32
    %v890 = vpop.permute.xlu0 %889
    %892 = vst.msk [vmem:[#allocation2 + $0x8] sm:$0xc] %vm451, %v890
    %v893 = vrot.slane %v887, 2
    %894 = vrot.lane.b32.xlu0 %v893, 32
    %v895 = vpop.permute.xlu0 %894
    %v896 = vsel %vm148, %v895, 0
    %898 = vmatprep.subr.mxu0 0.0
    %899 = vmatpush1.msra.mxu0 0.0
    %900 = vmatprep.subr.mxu0 0.0
    %901 = vmatpush1.msra.mxu0 0.0
    %902 = vmatprep.subr.mxu0 0.0
    %903 = vmatpush1.msra.mxu0 0.0
    %904 = vmatprep.subr.mxu0 0.0
    %905 = vmatpush1.msra.mxu0 0.0
    %906 = vmatprep.subr.mxu0 0.0
    %907 = vmatpush1.msra.mxu0 0.0
    %908 = vmatprep.subr.mxu0 0.0
    %909 = vmatpush1.msra.mxu0 0.0
    %910 = vmatprep.subr.mxu0 0.0
    %911 = vmatpush1.msra.mxu0 0.0
    %912 = vmatprep.subr.mxu0 0.0
    %913 = vmatpush1.msra.mxu0 0.0
    %914 = vmatprep.subr.mxu0 0.0
    %915 = vmatpush1.msra.mxu0 0.0
    %916 = vmatprep.subr.mxu0 0.0
    %917 = vmatpush1.msra.mxu0 0.0
    %918 = vmatprep.subr.mxu0 0.0
    %919 = vmatpush1.msra.mxu0 0.0
    %920 = vmatprep.subr.mxu0 0.0
    %921 = vmatpush1.msra.mxu0 0.0
    %922 = vmatprep.subr.mxu0 0.0
    %923 = vmatpush1.msra.mxu0 %v233
    %924 = vmatprep.subr.mxu0 0.0
    %925 = vmatpush1.msra.mxu0 %v232
    %926 = vmatprep.subr.mxu0 0.0
    %927 = vmatpush1.msra.mxu0 %v231
    %928 = vmatprep.subr.mxu0 0.0
    %929 = vmatpush1.msra.mxu0 %v230
    %930 = vmatprep.subr.mxu0 0.0
    %931 = vmatpush2.msra.mxu0 0.0
    %932 = vmatprep.subr.mxu0 0.0
    %933 = vmatpush2.msra.mxu0 0.0
    %934 = vmatprep.subr.mxu0 0.0
    %935 = vmatpush2.msra.mxu0 0.0
    %936 = vmatprep.subr.mxu0 0.0
    %937 = vmatpush2.msra.mxu0 0.0
    %938 = vmatprep.subr.mxu0 0.0
    %939 = vmatpush2.msra.mxu0 0.0
    %940 = vmatprep.subr.mxu0 0.0
    %941 = vmatpush2.msra.mxu0 0.0
    %942 = vmatprep.subr.mxu0 0.0
    %943 = vmatpush2.msra.mxu0 0.0
    %944 = vmatprep.subr.mxu0 0.0
    %945 = vmatpush2.msra.mxu0 0.0
    %946 = vmatprep.subr.mxu0 0.0
    %947 = vmatpush2.msra.mxu0 0.0
    %948 = vmatprep.subr.mxu0 0.0
    %949 = vmatpush2.msra.mxu0 0.0
    %950 = vmatprep.subr.mxu0 0.0
    %951 = vmatpush2.msra.mxu0 0.0
    %952 = vmatprep.subr.mxu0 0.0
    %953 = vmatpush2.msra.mxu0 0.0
    %954 = vmatprep.subr.mxu0 0.0
    %955 = vmatpush2.msra.mxu0 0.0
    %956 = vmatprep.subr.mxu0 0.0
    %957 = vmatpush2.msra.mxu0 0.0
    %958 = vmatprep.subr.mxu0 0.0
    %959 = vmatpush2.msra.mxu0 0.0
    %960 = vmatprep.subr.mxu0 0.0
    %961 = vmatpush2.msra.mxu0 0.0
    %962 = vmatprep.mubr.f32.mxu0 0.0
    %963 = vmatmul.mubr.f32.gmra.mxu0 %v896
    %v964 = vpop.f32.mrf.mxu0
    %v965 = vadd.f32 0.0, %v964
    %v966 = vpop.f32.mrf.mxu0
    %967 = vdwg.mxu0
    %v969 = vrot.slane %v965, 4
    %v971 = vadd.f32 %v227, %v969
    %v972 = vxor.u32 %v971, 2147483648
    %v973 = vmul.f32 %v972, 1.442695
    %v974 = vpow.pop %v973
    %v975 = vadd.f32 %v974, 1.0
    %v976 = vrcp.pop %v975
    %v977 = vmul.f32 1.0, %v976
    %v978 = vtanh.pop %v971
    %v980 = vrot.slane %v881, 6
    %v982 = vmul.f32 %v977, %v980
    %984 = vrot.lane.b32.xlu0 %v978, 64
    %v985 = vpop.permute.xlu0 %984
    %v987 = vmul.f32 %v977, %v985
    %989 = vrot.lane.b32.xlu0 %v987, 32
    %v990 = vpop.permute.xlu0 %989
    %v992 = vadd.f32 %v982, %v990
    %v993 = vtanh.pop %v992
    %995 = vrot.lane.b32.xlu0 %v993, 64
    %v996 = vpop.permute.xlu0 %995
    %v998 = vmul.f32 %v977, %v996
    %1000 = vrot.lane.b32.xlu0 %v998, 32
    %v1001 = vpop.permute.xlu0 %1000
    %1003 = vst.msk [vmem:[#allocation2 + $0x8] sm:$0x30] %vm563, %v1001
    %v1004 = vrot.slane %v998, 4
    %1005 = vrot.lane.b32.xlu0 %v1004, 32
    %v1006 = vpop.permute.xlu0 %1005
    %v1007 = vsel %vm148, %v1006, 0
    %1009 = vmatprep.subr.mxu0 0.0
    %1010 = vmatpush1.msra.mxu0 0.0
    %1011 = vmatprep.subr.mxu0 0.0
    %1012 = vmatpush1.msra.mxu0 0.0
    %1013 = vmatprep.subr.mxu0 0.0
    %1014 = vmatpush1.msra.mxu0 0.0
    %1015 = vmatprep.subr.mxu0 0.0
    %1016 = vmatpush1.msra.mxu0 0.0
    %1017 = vmatprep.subr.mxu0 0.0
    %1018 = vmatpush1.msra.mxu0 0.0
    %1019 = vmatprep.subr.mxu0 0.0
    %1020 = vmatpush1.msra.mxu0 0.0
    %1021 = vmatprep.subr.mxu0 0.0
    %1022 = vmatpush1.msra.mxu0 0.0
    %1023 = vmatprep.subr.mxu0 0.0
    %1024 = vmatpush1.msra.mxu0 0.0
    %1025 = vmatprep.subr.mxu0 0.0
    %1026 = vmatpush1.msra.mxu0 0.0
    %1027 = vmatprep.subr.mxu0 0.0
    %1028 = vmatpush1.msra.mxu0 0.0
    %1029 = vmatprep.subr.mxu0 0.0
    %1030 = vmatpush1.msra.mxu0 0.0
    %1031 = vmatprep.subr.mxu0 0.0
    %1032 = vmatpush1.msra.mxu0 0.0
    %1033 = vmatprep.subr.mxu0 0.0
    %1034 = vmatpush1.msra.mxu0 %v233
    %1035 = vmatprep.subr.mxu0 0.0
    %1036 = vmatpush1.msra.mxu0 %v232
    %1037 = vmatprep.subr.mxu0 0.0
    %1038 = vmatpush1.msra.mxu0 %v231
    %1039 = vmatprep.subr.mxu0 0.0
    %1040 = vmatpush1.msra.mxu0 %v230
    %1041 = vmatprep.subr.mxu0 0.0
    %1042 = vmatpush2.msra.mxu0 0.0
    %1043 = vmatprep.subr.mxu0 0.0
    %1044 = vmatpush2.msra.mxu0 0.0
    %1045 = vmatprep.subr.mxu0 0.0
    %1046 = vmatpush2.msra.mxu0 0.0
    %1047 = vmatprep.subr.mxu0 0.0
    %1048 = vmatpush2.msra.mxu0 0.0
    %1049 = vmatprep.subr.mxu0 0.0
    %1050 = vmatpush2.msra.mxu0 0.0
    %1051 = vmatprep.subr.mxu0 0.0
    %1052 = vmatpush2.msra.mxu0 0.0
    %1053 = vmatprep.subr.mxu0 0.0
    %1054 = vmatpush2.msra.mxu0 0.0
    %1055 = vmatprep.subr.mxu0 0.0
    %1056 = vmatpush2.msra.mxu0 0.0
    %1057 = vmatprep.subr.mxu0 0.0
    %1058 = vmatpush2.msra.mxu0 0.0
    %1059 = vmatprep.subr.mxu0 0.0
    %1060 = vmatpush2.msra.mxu0 0.0
    %1061 = vmatprep.subr.mxu0 0.0
    %1062 = vmatpush2.msra.mxu0 0.0
    %1063 = vmatprep.subr.mxu0 0.0
    %1064 = vmatpush2.msra.mxu0 0.0
    %1065 = vmatprep.subr.mxu0 0.0
    %1066 = vmatpush2.msra.mxu0 0.0
    %1067 = vmatprep.subr.mxu0 0.0
    %1068 = vmatpush2.msra.mxu0 0.0
    %1069 = vmatprep.subr.mxu0 0.0
    %1070 = vmatpush2.msra.mxu0 0.0
    %1071 = vmatprep.subr.mxu0 0.0
    %1072 = vmatpush2.msra.mxu0 0.0
    %1073 = vmatprep.mubr.f32.mxu0 0.0
    %1074 = vmatmul.mubr.f32.gmra.mxu0 %v1007
    %v1075 = vpop.f32.mrf.mxu0
    %v1076 = vadd.f32 0.0, %v1075
    %v1077 = vpop.f32.mrf.mxu0
    %1078 = vdwg.mxu0
    %v1080 = vrot.slane %v1076, 2
    %v1082 = vadd.f32 %v227, %v1080
    %v1083 = vxor.u32 %v1082, 2147483648
    %v1084 = vmul.f32 %v1083, 1.442695
    %v1085 = vpow.pop %v1084
    %v1086 = vadd.f32 %v1085, 1.0
    %v1087 = vrcp.pop %v1086
    %v1088 = vmul.f32 1.0, %v1087
    %v1089 = vtanh.pop %v1082
    %v1091 = vrot.slane %v992, 6
    %v1093 = vmul.f32 %v1088, %v1091
    %1095 = vrot.lane.b32.xlu0 %v1089, 64
    %v1096 = vpop.permute.xlu0 %1095
    %v1098 = vmul.f32 %v1088, %v1096
    %1100 = vrot.lane.b32.xlu0 %v1098, 32
    %v1101 = vpop.permute.xlu0 %1100
    %v1103 = vadd.f32 %v1093, %v1101
    %v1104 = vtanh.pop %v1103
    %1106 = vrot.lane.b32.xlu0 %v1104, 64
    %v1107 = vpop.permute.xlu0 %1106
    %v1109 = vmul.f32 %v1088, %v1107
    %1111 = vrot.lane.b32.xlu0 %v1109, 32
    %v1112 = vpop.permute.xlu0 %1111
    %1114 = vst.msk [vmem:[#allocation2 + $0x8] sm:$0xc0] %vm675, %v1112
    %1115 = vst.msk [vmem:[#allocation5 - $0x6] sm:$0xc0] %vm675, %v1112
    %1117 = vrot.lane.b32.xlu0 %v1103, 96
    %v1118 = vpop.permute.xlu0 %1117
    %1120 = vst.msk [vmem:[#allocation7 - $0x6] sm:$0xc0] %vm675, %v1118
    %v1121 = vld [vmem:[#allocation2] sm:$0xff]
    %v1122 = vld [vmem:[#allocation2 + $0x8] sm:$0xff]
    %v1123 = vld [vmem:[%s5] sm:$0xff]
    %v1124 = vld [vmem:[%s5 + $0x8] sm:$0xff]
    %v1125 = vld [vmem:[%s5 + $0x10] sm:$0xff]
    %v1126 = vld [vmem:[%s5 + $0x18] sm:$0xff]
    %v1127 = vld [vmem:[%s6] sm:$0x1]
    %v1129 = vlaneseq
    %v1130 = vshrl.u32 %v1129, 7
    %v1131 = vsub.s32 0, %v1130
    %v1132 = vrot.slane %v1127, %v1131
    %v1135 = vsel %vm148, %v1121, 0
    %v1138 = vsel %vm148, %v1122, 0
    %1140 = vmatprep.subr.mxu0 0.0
    %1141 = vmatpush1.msra.mxu0 0.0
    %1142 = vmatprep.subr.mxu0 0.0
    %1143 = vmatpush1.msra.mxu0 0.0
    %1144 = vmatprep.subr.mxu0 0.0
    %1145 = vmatpush1.msra.mxu0 0.0
    %1146 = vmatprep.subr.mxu0 0.0
    %1147 = vmatpush1.msra.mxu0 0.0
    %1148 = vmatprep.subr.mxu0 0.0
    %1149 = vmatpush1.msra.mxu0 0.0
    %1150 = vmatprep.subr.mxu0 0.0
    %1151 = vmatpush1.msra.mxu0 0.0
    %1152 = vmatprep.subr.mxu0 0.0
    %1153 = vmatpush1.msra.mxu0 0.0
    %1154 = vmatprep.subr.mxu0 0.0
    %1155 = vmatpush1.msra.mxu0 0.0
    %1156 = vmatprep.subr.mxu0 0.0
    %1157 = vmatpush1.msra.mxu0 0.0
    %1158 = vmatprep.subr.mxu0 0.0
    %1159 = vmatpush1.msra.mxu0 0.0
    %1160 = vmatprep.subr.mxu0 0.0
    %1161 = vmatpush1.msra.mxu0 0.0
    %1162 = vmatprep.subr.mxu0 0.0
    %1163 = vmatpush1.msra.mxu0 0.0
    %1164 = vmatprep.subr.mxu0 0.0
    %1165 = vmatpush1.msra.mxu0 %v1126
    %1166 = vmatprep.subr.mxu0 0.0
    %1167 = vmatpush1.msra.mxu0 %v1125
    %1168 = vmatprep.subr.mxu0 0.0
    %1169 = vmatpush1.msra.mxu0 %v1124
    %1170 = vmatprep.subr.mxu0 0.0
    %1171 = vmatpush1.msra.mxu0 %v1123
    %1172 = vmatprep.subr.mxu0 0.0
    %1173 = vmatpush2.msra.mxu0 0.0
    %1174 = vmatprep.subr.mxu0 0.0
    %1175 = vmatpush2.msra.mxu0 0.0
    %1176 = vmatprep.subr.mxu0 0.0
    %1177 = vmatpush2.msra.mxu0 0.0
    %1178 = vmatprep.subr.mxu0 0.0
    %1179 = vmatpush2.msra.mxu0 0.0
    %1180 = vmatprep.subr.mxu0 0.0
    %1181 = vmatpush2.msra.mxu0 0.0
    %1182 = vmatprep.subr.mxu0 0.0
    %1183 = vmatpush2.msra.mxu0 0.0
    %1184 = vmatprep.subr.mxu0 0.0
    %1185 = vmatpush2.msra.mxu0 0.0
    %1186 = vmatprep.subr.mxu0 0.0
    %1187 = vmatpush2.msra.mxu0 0.0
    %1188 = vmatprep.subr.mxu0 0.0
    %1189 = vmatpush2.msra.mxu0 0.0
    %1190 = vmatprep.subr.mxu0 0.0
    %1191 = vmatpush2.msra.mxu0 0.0
    %1192 = vmatprep.subr.mxu0 0.0
    %1193 = vmatpush2.msra.mxu0 0.0
    %1194 = vmatprep.subr.mxu0 0.0
    %1195 = vmatpush2.msra.mxu0 0.0
    %1196 = vmatprep.subr.mxu0 0.0
    %1197 = vmatpush2.msra.mxu0 0.0
    %1198 = vmatprep.subr.mxu0 0.0
    %1199 = vmatpush2.msra.mxu0 0.0
    %1200 = vmatprep.subr.mxu0 0.0
    %1201 = vmatpush2.msra.mxu0 0.0
    %1202 = vmatprep.subr.mxu0 0.0
    %1203 = vmatpush2.msra.mxu0 0.0
    %1204 = vmatprep.mubr.f32.mxu0 0.0
    %1205 = vmatmul.mubr.f32.gmra.mxu0 %v1135
    %v1206 = vpop.f32.mrf.mxu0
    %v1207 = vadd.f32 %v1132, %v1206
    %v1208 = vpop.f32.mrf.mxu0
    %1209 = vmatprep.mubr.f32.mxu0 0.0
    %1210 = vmatmul.mubr.f32.gmra.mxu0 %v1138
    %v1211 = vpop.f32.mrf.mxu0
    %v1212 = vadd.f32 %v1132, %v1211
    %v1213 = vpop.f32.mrf.mxu0
    %1214 = vdwg.mxu0
    %1215 = vst.msk [vmem:[#allocation3] sm:$0xff] %vm55, %v1207
    %1216 = vst.msk [vmem:[#allocation3 + $0x8] sm:$0xff] %vm55, %v1212
    // Predicated region
    $region38: #{glyph_embedding_for_lm_forward.1} parent=1 // pred_check
      _
    $region39: #{glyph_embedding_for_lm_forward.1} parent=1 // pred_check_branch
      %1218 = sbr.rel (0) target = $region41
    $region40: #{glyph_embedding_for_lm_forward.1} parent=1 // pred_region
      %s1220 = ssub.s32 256, 256
      %1221 = vsyncadd [#allocation4], %s1220
      %s1222 = sshll.u32 [#allocation3], 4
      %s1223 = int_to_ptr.vmem [resolvable:$true] %s1222
      %1228 = dma.vmem_to_hbm [thread:$0]  %s1223, 256, %s9, [#allocation4], 128, 128, 8
    $region41: #{glyph_embedding_for_lm_forward.1} parent=1 // pred_fallthru
      _
    // Predicated region
    $region42: #{glyph_embedding_for_lm_forward.1} parent=1 // pred_check
      _
    $region43: #{glyph_embedding_for_lm_forward.1} parent=1 // pred_check_branch
      %1230 = sbr.rel (0) target = $region45
    $region44: #{glyph_embedding_for_lm_forward.1} parent=1 // pred_region
      %s1232 = ssub.s32 32, 32
      %1233 = vsyncadd [#allocation6], %s1232
      %s1235 = sshll.u32 [#allocation5], 4
      %s1236 = int_to_ptr.vmem [resolvable:$true] %s1235
      %1238 = dma.vmem_to_hbm [thread:$0]  %s1236, 32, %s10, [#allocation6]
    $region45: #{glyph_embedding_for_lm_forward.1} parent=1 // pred_fallthru
      _
    // Predicated region
    $region46: #{glyph_embedding_for_lm_forward.1} parent=1 // pred_check
      _
    $region47: #{glyph_embedding_for_lm_forward.1} parent=1 // pred_check_branch
      %1240 = sbr.rel (0) target = $region49
    $region48: #{glyph_embedding_for_lm_forward.1} parent=1 // pred_region
      %s1242 = ssub.s32 32, 32
      %1243 = vsyncadd [#allocation6], %s1242
      %s1245 = sshll.u32 [#allocation7], 4
      %s1246 = int_to_ptr.vmem [resolvable:$true] %s1245
      %1248 = dma.vmem_to_hbm [thread:$0]  %s1246, 32, %s11, [#allocation6]
    $region49: #{glyph_embedding_for_lm_forward.1} parent=1 // pred_fallthru
      _
    // Predicated region
    $region50: #{glyph_embedding_for_lm_forward.1} parent=1 // pred_check
      _
    $region51: #{glyph_embedding_for_lm_forward.1} parent=1 // pred_check_branch
      %1250 = sbr.rel (0) target = $region53
    $region52: #{glyph_embedding_for_lm_forward.1} parent=1 // pred_region
      %1251 = dma.done [#allocation4], 256
    $region53: #{glyph_embedding_for_lm_forward.1} parent=1 // pred_fallthru
      _
    // Predicated region
    $region54: #{glyph_embedding_for_lm_forward.1} parent=1 // pred_check
      _
    $region55: #{glyph_embedding_for_lm_forward.1} parent=1 // pred_check_branch
      %1253 = sbr.rel (0) target = $region57
    $region56: #{glyph_embedding_for_lm_forward.1} parent=1 // pred_region
      %1254 = dma.done [#allocation6], 32
    $region57: #{glyph_embedding_for_lm_forward.1} parent=1 // pred_fallthru
      _
    // Predicated region
    $region58: #{glyph_embedding_for_lm_forward.1} parent=1 // pred_check
      _
    $region59: #{glyph_embedding_for_lm_forward.1} parent=1 // pred_check_branch
      %1256 = sbr.rel (0) target = $region61
    $region60: #{glyph_embedding_for_lm_forward.1} parent=1 // pred_region
      %1257 = dma.done [#allocation6], 32
    $region61: #{glyph_embedding_for_lm_forward.1} parent=1 // pred_fallthru
      _
    %1258 = vsyncpa [#allocation4], 1
    %1259 = vsyncpa [#allocation6], 1

</llo_original>
